<compile_context>
chip_gen: v7x
topology: tpu7x:2x2x1
jax: 0.10.0
libtpu: 0.0.40
codegen_flags: <defaults>
</compile_context>

<pallas_src>
import jax
import jax.numpy as jnp
from jax.experimental import pallas as pl
from jax.experimental.pallas import tpu as pltpu

# ----------------------- tiny synthetic "BERT" config -----------------------
VOCAB = 64
HIDDEN = 32
N_HEADS = 2
HEAD_DIM = HIDDEN // N_HEADS
N_LAYERS = 2
FFN = 64
MAX_POS = 16
LN_EPS = 1e-12
PAD_ID = 0


def _layernorm(x, g, b):
    mu = jnp.mean(x, axis=-1, keepdims=True)
    var = jnp.mean((x - mu) ** 2, axis=-1, keepdims=True)
    return (x - mu) * jax.lax.rsqrt(var + LN_EPS) * g + b


# ------------------------------ fused Pallas kernel ------------------------------
def fused_encoder_kernel(ids_ref, nmask_ref, postype_ref, wemb_ref, embln_ref,
                         wqkv_ref, bqkv_ref, wo_ref, wi_ref, bi_ref, wf_ref,
                         vec_ref, o_ref):
    B, S = ids_ref.shape
    H = wemb_ref.shape[1]
    NH, DH = N_HEADS, HEAD_DIM
    M = B * S
    scale = 1.0 / float(DH) ** 0.5

    # ---- fused embedding lookup: one-hot (M,VOCAB) @ (VOCAB,H) on the MXU ----
    ids = ids_ref[...]                                              # (B,S) int32
    iota = jax.lax.broadcasted_iota(jnp.int32, (B, S, VOCAB), 2)
    onehot = (ids[:, :, None] == iota).astype(jnp.float32).reshape(M, VOCAB)
    emb = jnp.dot(onehot, wemb_ref[...],
                  preferred_element_type=jnp.float32)               # (M,H)
    emb = (emb.reshape(B, S, H) + postype_ref[...][None]).reshape(M, H)

    embln = embln_ref[...]
    x = _layernorm(emb, embln[0:1], embln[1:2])                     # (M,H) f32

    # ---- layer-invariant additive key mask (hoisted above the layer loop) ----
    neg = nmask_ref[...]                                            # (B,1,S)

    for li in range(N_LAYERS):       # static unroll; x never leaves the chip
        wqkv = wqkv_ref[li]          # (H, 3H) bf16   [Wq | Wk | Wv]
        bqkv = bqkv_ref[li]          # (1, 3H) f32
        wo = wo_ref[li]              # (H, H)  bf16
        wi = wi_ref[li]              # (H, F)  bf16
        bi = bi_ref[li]              # (1, F)  f32
        wf = wf_ref[li]              # (F, H)  bf16
        vec = vec_ref[li]            # (6, H)  f32: bo,ln1g,ln1b,bf,ln2g,ln2b
        bo, ln1g, ln1b = vec[0:1], vec[1:2], vec[2:3]
        bf_b, ln2g, ln2b = vec[3:4], vec[4:5], vec[5:6]

        # -- fused QKV projection: one shared-weight 2D matmul, x cast once --
        xb = x.astype(jnp.bfloat16)                                  # (M,H) bf16
        qkv = jnp.dot(xb, wqkv, preferred_element_type=jnp.float32) + bqkv  # (M,3H)
        q = qkv[:, 0:H]              # lane offsets 0 / H / 2H (multiples of 32)
        k = qkv[:, H:2 * H]
        v = qkv[:, 2 * H:3 * H]

        # -- attention: per head, batched over B (contiguous DH-wide lane slices) --
        ctx_heads = []
        for h in range(NH):
            qh = q[:, h * DH:(h + 1) * DH].reshape(B, S, DH).astype(jnp.bfloat16)
            kh = k[:, h * DH:(h + 1) * DH].reshape(B, S, DH).astype(jnp.bfloat16)
            vh = v[:, h * DH:(h + 1) * DH].reshape(B, S, DH).astype(jnp.bfloat16)
            scores = jax.lax.dot_general(
                qh, kh, (((2,), (2,)), ((0,), (0,))),
                preferred_element_type=jnp.float32) * scale          # (B,S,S)
            scores = scores + neg
            scores = scores - jnp.max(scores, axis=-1, keepdims=True)
            p = jnp.exp(scores)
            p = p * pl.reciprocal(jnp.sum(p, axis=-1, keepdims=True), approx=False)
            ctx_heads.append(jax.lax.dot_general(
                p.astype(jnp.bfloat16), vh, (((2,), (1,)), ((0,), (0,))),
                preferred_element_type=jnp.float32))                 # (B,S,DH)
        ctx = jnp.concatenate(ctx_heads, axis=-1).reshape(M, H)      # (M,H)

        # -- output projection: single shared-weight 2D matmul (no head-sum) --
        attn = jnp.dot(ctx.astype(jnp.bfloat16), wo,
                       preferred_element_type=jnp.float32) + bo      # (M,H)
        h1 = _layernorm(x + attn, ln1g, ln1b)

        # -- FFN: shared-weight 2D matmuls, h1 cast once --
        h1b = h1.astype(jnp.bfloat16)
        f = jnp.dot(h1b, wi, preferred_element_type=jnp.float32) + bi   # (M,F)
        # TODO(synk): HF BERT uses exact erf-GELU; tanh approximation used here.
        f = jax.nn.gelu(f, approximate=True)
        ff = jnp.dot(f.astype(jnp.bfloat16), wf,
                     preferred_element_type=jnp.float32) + bf_b         # (M,H)
        x = _layernorm(h1 + ff, ln2g, ln2b)

    # -- lane-dense store: (B, S*H)=256 lanes, built from supported slice+concat --
    x3 = x.reshape(B, S, H)
    o_ref[...] = jnp.concatenate(
        [x3[:, si, :] for si in range(S)], axis=-1).astype(o_ref.dtype)


# ------------------------------ Pallas wrapper ------------------------------
def fused_encoder(token_ids, add_mask, pos_type, packed):
    B, S = token_ids.shape
    H = HIDDEN

    def whole(shape):
        n = len(shape)
        return pl.BlockSpec(shape, lambda i, _n=n: (0,) * _n)

    in_arrays = (token_ids, add_mask, pos_type, packed["wemb"], packed["embln"],
                 packed["wqkv"], packed["bqkv"], packed["wo"], packed["wi"],
                 packed["bi"], packed["wf"], packed["vec"])

    out = pl.pallas_call(
        fused_encoder_kernel,
        out_shape=jax.ShapeDtypeStruct((B, S * H), jnp.float32),
        grid=(1,),                                   # one step: overhead-bound size
        in_specs=[whole(a.shape) for a in in_arrays],
        out_specs=whole((B, S * H)),
        compiler_params=pltpu.CompilerParams(
            dimension_semantics=("arbitrary",)),
    )(*in_arrays)
    return out.reshape(B, S, H)                      # free row-major reshape on host


# -------------------------- deterministic parameters -------------------------
def init_params(key):
    def nrm(k, shape, scale=0.02):
        return scale * jax.random.normal(k, shape, dtype=jnp.float32)

    keys = jax.random.split(key, 4 + N_LAYERS)
    params = {
        "word_emb": nrm(keys[0], (VOCAB, HIDDEN)),
        "pos_emb": nrm(keys[1], (MAX_POS, HIDDEN)),
        "type_emb": nrm(keys[2], (2, HIDDEN)),
        "emb_ln_g": jnp.ones((1, HIDDEN), jnp.float32),
        "emb_ln_b": jnp.zeros((1, HIDDEN), jnp.float32),
        "layers": [],
    }
    for l in range(N_LAYERS):
        lk = jax.random.split(keys[4 + l], 8)
        layer = (
            nrm(lk[0], (HIDDEN, HIDDEN)), jnp.zeros((1, HIDDEN), jnp.float32),  # wq, bq
            nrm(lk[1], (HIDDEN, HIDDEN)), jnp.zeros((1, HIDDEN), jnp.float32),  # wk, bk
            nrm(lk[2], (HIDDEN, HIDDEN)), jnp.zeros((1, HIDDEN), jnp.float32),  # wv, bv
            nrm(lk[3], (HIDDEN, HIDDEN)), jnp.zeros((1, HIDDEN), jnp.float32),  # wo, bo
            jnp.ones((1, HIDDEN), jnp.float32), jnp.zeros((1, HIDDEN), jnp.float32),  # ln1
            nrm(lk[4], (HIDDEN, FFN)), jnp.zeros((1, FFN), jnp.float32),        # wi, bi
            nrm(lk[5], (FFN, HIDDEN)), jnp.zeros((1, HIDDEN), jnp.float32),     # wf, bf
            jnp.ones((1, HIDDEN), jnp.float32), jnp.zeros((1, HIDDEN), jnp.float32),  # ln2
        )
        params["layers"].append(layer)
    return params


def pack_params(params):
    """Stack per-layer weights: QKV fused on the output axis, bf16 MXU operands."""
    wqkv_l, bqkv_l, wo_l, wi_l, bi_l, wf_l, vec_l = [], [], [], [], [], [], []
    for (wq, bq, wk, bk, wv, bv, wo, bo, l1g, l1b,
         wi, bi, wf, bf, l2g, l2b) in params["layers"]:
        wqkv_l.append(jnp.concatenate([wq, wk, wv], axis=1))          # (H, 3H)
        bqkv_l.append(jnp.concatenate([bq, bk, bv], axis=1))          # (1, 3H)
        wo_l.append(wo)
        wi_l.append(wi)
        bi_l.append(bi)
        wf_l.append(wf)
        vec_l.append(jnp.concatenate([bo, l1g, l1b, bf, l2g, l2b], axis=0))  # (6,H)

    return {
        "wemb": params["word_emb"].astype(jnp.float32),    # (VOCAB,H) exact table
        "embln": jnp.concatenate([params["emb_ln_g"], params["emb_ln_b"]], axis=0),
        "wqkv": jnp.stack(wqkv_l).astype(jnp.bfloat16),    # (L,H,3H)
        "bqkv": jnp.stack(bqkv_l).astype(jnp.float32),     # (L,1,3H)
        "wo": jnp.stack(wo_l).astype(jnp.bfloat16),        # (L,H,H)
        "wi": jnp.stack(wi_l).astype(jnp.bfloat16),        # (L,H,F)
        "bi": jnp.stack(bi_l).astype(jnp.float32),         # (L,1,F)
        "wf": jnp.stack(wf_l).astype(jnp.bfloat16),        # (L,F,H)
        "vec": jnp.stack(vec_l).astype(jnp.float32),       # (L,6,H)
    }


# --------------------------------- forward ----------------------------------
def embeddings_auto_forward(params, packed, token_ids, pad_mask, token_indices):
    """Mirror of EmbeddingsAuto.forward: returns (hidden_states, pad_mask, indices)."""
    B, S = token_ids.shape
    # layer-invariant additive key mask + (pos + type) embedding table, built once
    add_mask = ((1.0 - pad_mask.astype(jnp.float32)) * (-1e9)).reshape(B, 1, S)
    pos_type = (params["pos_emb"][:S] + params["type_emb"][0][None, :]).astype(jnp.float32)
    hidden = fused_encoder(token_ids.astype(jnp.int32), add_mask, pos_type, packed)
    return hidden, pad_mask, token_indices


# ----------------------------- pure-JAX reference ----------------------------
def embed_reference(params, token_ids):
    S = token_ids.shape[1]
    return (params["word_emb"][token_ids]
            + params["pos_emb"][:S][None, :, :]
            + params["type_emb"][0][None, None, :]).astype(jnp.float32)


def encoder_reference(params, emb, pad_mask):
    x = _layernorm(emb, params["emb_ln_g"], params["emb_ln_b"])
    B, S, H = x.shape
    neg = ((1.0 - pad_mask.astype(jnp.float32)) * (-1e9))[:, None, None, :]
    for (wq, bq, wk, bk, wv, bv, wo, bo, l1g, l1b,
         wi, bi, wf, bf, l2g, l2b) in params["layers"]:
        q, k, v = x @ wq + bq, x @ wk + bk, x @ wv + bv

        def split(t):
            return t.reshape(B, S, N_HEADS, HEAD_DIM).transpose(0, 2, 1, 3)

        qh, kh, vh = split(q), split(k), split(v)
        s = jnp.einsum("bhqd,bhkd->bhqk", qh, kh) / (HEAD_DIM ** 0.5) + neg
        p = jax.nn.softmax(s, axis=-1)
        ctx = jnp.einsum("bhqk,bhkd->bhqd", p, vh)
        ctx = ctx.transpose(0, 2, 1, 3).reshape(B, S, H)
        h1 = _layernorm(x + ctx @ wo + bo, l1g, l1b)
        f = jax.nn.gelu(h1 @ wi + bi, approximate=True)
        x = _layernorm(h1 + f @ wf + bf, l2g, l2b)
    return x


# ----------------------------------- main ------------------------------------
if __name__ == "__main__":
    key = jax.random.PRNGKey(0)
    pkey, ikey = jax.random.split(key)
    params = init_params(pkey)
    packed = pack_params(params)

    # Two "tokenized" sequences of different lengths, padded to S=8 (mimics
    # pad_sequence(..., padding_value=pad_token_id) in the PyTorch forward).
    B, S = 2, 8
    lengths = jnp.array([8, 5], dtype=jnp.int32)
    raw_ids = jax.random.randint(ikey, (B, S), 1, VOCAB, dtype=jnp.int32)
    pos = jnp.arange(S)[None, :]
    pad_mask = (pos < lengths[:, None]).astype(jnp.int32)       # (B, S)
    token_ids = jnp.where(pad_mask == 1, raw_ids, PAD_ID)       # (B, S)
    token_indices = [list(range(1, int(l))) for l in lengths]   # host-side metadata

    hidden, mask_out, idx_out = embeddings_auto_forward(
        params, packed, token_ids, pad_mask, token_indices)
    hidden = jax.block_until_ready(hidden)
    mask_out = jax.block_until_ready(mask_out)

    assert hidden.shape == (B, S, HIDDEN)
    assert mask_out.shape == (B, S)
    assert bool(jnp.all(jnp.isfinite(hidden)))

    # sanity check fused kernel (bf16 matmuls) against the f32 pure-JAX reference
    ref = encoder_reference(params, embed_reference(params, token_ids), pad_mask)
    err = float(jnp.max(jnp.abs(hidden - ref)))
    assert err < 1e-1, f"kernel/reference mismatch: {err}"

    print("KERNEL_OK")
</pallas_src>

<mosaic_0001>
module attributes {stable_mosaic.version = 11 : i64} {
  func.func @fused_encoder_kernel(%arg0: i32, %arg1: memref<2x8xi32, #tpu.memory_space<vmem>>, %arg2: memref<2x1x8xf32, #tpu.memory_space<vmem>>, %arg3: memref<8x32xf32, #tpu.memory_space<vmem>>, %arg4: memref<64x32xf32, #tpu.memory_space<vmem>>, %arg5: memref<2x32xf32, #tpu.memory_space<vmem>>, %arg6: memref<2x32x96xbf16, #tpu.memory_space<vmem>>, %arg7: memref<2x1x96xf32, #tpu.memory_space<vmem>>, %arg8: memref<2x32x32xbf16, #tpu.memory_space<vmem>>, %arg9: memref<2x32x64xbf16, #tpu.memory_space<vmem>>, %arg10: memref<2x1x64xf32, #tpu.memory_space<vmem>>, %arg11: memref<2x64x32xbf16, #tpu.memory_space<vmem>>, %arg12: memref<2x6x32xf32, #tpu.memory_space<vmem>>, %arg13: memref<2x256xf32, #tpu.memory_space<vmem>>) attributes {dimension_semantics = [#tpu.dimension_semantics<arbitrary>], iteration_bounds = array<i64: 1>, scalar_prefetch = 0 : i64, scratch_operands = 0 : i64, tpu.core_type = #tpu.core_type<tc>, window_params = [{pipeline_mode = #tpu.pipeline_mode<synchronous>, transform_indices = @transform_0, window_bounds = array<i64: 2, 8>}, {pipeline_mode = #tpu.pipeline_mode<synchronous>, transform_indices = @transform_1, window_bounds = array<i64: 2, 1, 8>}, {pipeline_mode = #tpu.pipeline_mode<synchronous>, transform_indices = @transform_2, window_bounds = array<i64: 8, 32>}, {pipeline_mode = #tpu.pipeline_mode<synchronous>, transform_indices = @transform_3, window_bounds = array<i64: 64, 32>}, {pipeline_mode = #tpu.pipeline_mode<synchronous>, transform_indices = @transform_4, window_bounds = array<i64: 2, 32>}, {pipeline_mode = #tpu.pipeline_mode<synchronous>, transform_indices = @transform_5, window_bounds = array<i64: 2, 32, 96>}, {pipeline_mode = #tpu.pipeline_mode<synchronous>, transform_indices = @transform_6, window_bounds = array<i64: 2, 1, 96>}, {pipeline_mode = #tpu.pipeline_mode<synchronous>, transform_indices = @transform_7, window_bounds = array<i64: 2, 32, 32>}, {pipeline_mode = #tpu.pipeline_mode<synchronous>, transform_indices = @transform_8, window_bounds = array<i64: 2, 32, 64>}, {pipeline_mode = #tpu.pipeline_mode<synchronous>, transform_indices = @transform_9, window_bounds = array<i64: 2, 1, 64>}, {pipeline_mode = #tpu.pipeline_mode<synchronous>, transform_indices = @transform_10, window_bounds = array<i64: 2, 64, 32>}, {pipeline_mode = #tpu.pipeline_mode<synchronous>, transform_indices = @transform_11, window_bounds = array<i64: 2, 6, 32>}, {pipeline_mode = #tpu.pipeline_mode<synchronous>, transform_indices = @transform_12, window_bounds = array<i64: 2, 256>}]} {
    %c0 = arith.constant 0 : index
    %c0_0 = arith.constant 0 : index
    %0 = vector.load %arg1[%c0, %c0_0] : memref<2x8xi32, #tpu.memory_space<vmem>>, vector<2x8xi32>
    %1 = tpu.iota {dimensions = array<i32: 2>} : vector<2x8x64xi32>
    %2 = vector.shape_cast %0 : vector<2x8xi32> to vector<2x8x1xi32>
    %3 = vector.broadcast %2 : vector<2x8x1xi32> to vector<2x8x64xi32>
    %4 = arith.cmpi eq, %3, %1 : vector<2x8x64xi32>
    %5 = arith.extui %4 : vector<2x8x64xi1> to vector<2x8x64xi32>
    %6 = arith.sitofp %5 : vector<2x8x64xi32> to vector<2x8x64xf32>
    %7 = vector.shape_cast %6 : vector<2x8x64xf32> to vector<16x64xf32>
    %c0_1 = arith.constant 0 : index
    %c0_2 = arith.constant 0 : index
    %8 = vector.load %arg4[%c0_1, %c0_2] : memref<64x32xf32, #tpu.memory_space<vmem>>, vector<64x32xf32>
    %cst = arith.constant dense<0.000000e+00> : vector<16x32xf32>
    %9 = tpu.matmul %7, %8, %cst {dimension_numbers = #tpu.dot_dimension_numbers<[1], [0], [0], [1], [0, 0, 1, 1], [], []>} : vector<16x64xf32>, vector<64x32xf32>, vector<16x32xf32> -> vector<16x32xf32>
    %10 = vector.shape_cast %9 : vector<16x32xf32> to vector<2x8x32xf32>
    %c0_3 = arith.constant 0 : index
    %c0_4 = arith.constant 0 : index
    %11 = vector.load %arg3[%c0_3, %c0_4] : memref<8x32xf32, #tpu.memory_space<vmem>>, vector<8x32xf32>
    %12 = vector.shape_cast %11 : vector<8x32xf32> to vector<1x8x32xf32>
    %13 = vector.broadcast %12 : vector<1x8x32xf32> to vector<2x8x32xf32>
    %14 = arith.addf %10, %13 : vector<2x8x32xf32>
    %15 = vector.shape_cast %14 : vector<2x8x32xf32> to vector<16x32xf32>
    %c0_5 = arith.constant 0 : index
    %c0_6 = arith.constant 0 : index
    %16 = vector.load %arg5[%c0_5, %c0_6] : memref<2x32xf32, #tpu.memory_space<vmem>>, vector<2x32xf32>
    %17 = vector.extract_strided_slice %16 {offsets = [0, 0], sizes = [1, 32], strides = [1, 1]} : vector<2x32xf32> to vector<1x32xf32>
    %18 = vector.extract_strided_slice %16 {offsets = [1, 0], sizes = [1, 32], strides = [1, 1]} : vector<2x32xf32> to vector<1x32xf32>
    %cst_7 = arith.constant dense<0.000000e+00> : vector<16xf32>
    %19 = vector.multi_reduction <add>, %15, %cst_7 [1] : vector<16x32xf32> to vector<16xf32>
    %20 = vector.shape_cast %19 : vector<16xf32> to vector<16x1xf32>
    %cst_8 = arith.constant 3.200000e+01 : f32
    %21 = vector.broadcast %cst_8 : f32 to vector<16x1xf32>
    %22 = arith.divf %20, %21 : vector<16x1xf32>
    %23 = vector.broadcast %22 : vector<16x1xf32> to vector<16x32xf32>
    %24 = arith.subf %15, %23 : vector<16x32xf32>
    %25 = arith.mulf %24, %24 : vector<16x32xf32>
    %cst_9 = arith.constant dense<0.000000e+00> : vector<16xf32>
    %26 = vector.multi_reduction <add>, %25, %cst_9 [1] : vector<16x32xf32> to vector<16xf32>
    %27 = vector.shape_cast %26 : vector<16xf32> to vector<16x1xf32>
    %cst_10 = arith.constant 3.200000e+01 : f32
    %28 = vector.broadcast %cst_10 : f32 to vector<16x1xf32>
    %29 = arith.divf %27, %28 : vector<16x1xf32>
    %30 = vector.broadcast %22 : vector<16x1xf32> to vector<16x32xf32>
    %31 = arith.subf %15, %30 : vector<16x32xf32>
    %cst_11 = arith.constant 9.99999996E-13 : f32
    %32 = vector.broadcast %cst_11 : f32 to vector<16x1xf32>
    %33 = arith.addf %29, %32 : vector<16x1xf32>
    %34 = math.rsqrt %33 : vector<16x1xf32>
    %35 = vector.broadcast %34 : vector<16x1xf32> to vector<16x32xf32>
    %36 = arith.mulf %31, %35 : vector<16x32xf32>
    %37 = vector.broadcast %17 : vector<1x32xf32> to vector<16x32xf32>
    %38 = arith.mulf %36, %37 : vector<16x32xf32>
    %39 = vector.broadcast %18 : vector<1x32xf32> to vector<16x32xf32>
    %40 = arith.addf %38, %39 : vector<16x32xf32>
    %c0_12 = arith.constant 0 : index
    %c0_13 = arith.constant 0 : index
    %c0_14 = arith.constant 0 : index
    %41 = vector.load %arg2[%c0_12, %c0_13, %c0_14] : memref<2x1x8xf32, #tpu.memory_space<vmem>>, vector<2x1x8xf32>
    %c0_15 = arith.constant 0 : index
    %c0_16 = arith.constant 0 : index
    %c0_17 = arith.constant 0 : index
    %42 = vector.load %arg6[%c0_15, %c0_16, %c0_17] : memref<2x32x96xbf16, #tpu.memory_space<vmem>>, vector<1x32x96xbf16>
    %43 = vector.shape_cast %42 : vector<1x32x96xbf16> to vector<32x96xbf16>
    %c0_18 = arith.constant 0 : index
    %c0_19 = arith.constant 0 : index
    %c0_20 = arith.constant 0 : index
    %44 = vector.load %arg7[%c0_18, %c0_19, %c0_20] : memref<2x1x96xf32, #tpu.memory_space<vmem>>, vector<1x1x96xf32>
    %45 = vector.shape_cast %44 : vector<1x1x96xf32> to vector<1x96xf32>
    %c0_21 = arith.constant 0 : index
    %c0_22 = arith.constant 0 : index
    %c0_23 = arith.constant 0 : index
    %46 = vector.load %arg8[%c0_21, %c0_22, %c0_23] : memref<2x32x32xbf16, #tpu.memory_space<vmem>>, vector<1x32x32xbf16>
    %47 = vector.shape_cast %46 : vector<1x32x32xbf16> to vector<32x32xbf16>
    %c0_24 = arith.constant 0 : index
    %c0_25 = arith.constant 0 : index
    %c0_26 = arith.constant 0 : index
    %48 = vector.load %arg9[%c0_24, %c0_25, %c0_26] : memref<2x32x64xbf16, #tpu.memory_space<vmem>>, vector<1x32x64xbf16>
    %49 = vector.shape_cast %48 : vector<1x32x64xbf16> to vector<32x64xbf16>
    %c0_27 = arith.constant 0 : index
    %c0_28 = arith.constant 0 : index
    %c0_29 = arith.constant 0 : index
    %50 = vector.load %arg10[%c0_27, %c0_28, %c0_29] : memref<2x1x64xf32, #tpu.memory_space<vmem>>, vector<1x1x64xf32>
    %51 = vector.shape_cast %50 : vector<1x1x64xf32> to vector<1x64xf32>
    %c0_30 = arith.constant 0 : index
    %c0_31 = arith.constant 0 : index
    %c0_32 = arith.constant 0 : index
    %52 = vector.load %arg11[%c0_30, %c0_31, %c0_32] : memref<2x64x32xbf16, #tpu.memory_space<vmem>>, vector<1x64x32xbf16>
    %53 = vector.shape_cast %52 : vector<1x64x32xbf16> to vector<64x32xbf16>
    %c0_33 = arith.constant 0 : index
    %c0_34 = arith.constant 0 : index
    %c0_35 = arith.constant 0 : index
    %54 = vector.load %arg12[%c0_33, %c0_34, %c0_35] : memref<2x6x32xf32, #tpu.memory_space<vmem>>, vector<1x6x32xf32>
    %55 = vector.shape_cast %54 : vector<1x6x32xf32> to vector<6x32xf32>
    %56 = vector.extract_strided_slice %55 {offsets = [0, 0], sizes = [1, 32], strides = [1, 1]} : vector<6x32xf32> to vector<1x32xf32>
    %57 = vector.extract_strided_slice %55 {offsets = [1, 0], sizes = [1, 32], strides = [1, 1]} : vector<6x32xf32> to vector<1x32xf32>
    %58 = vector.extract_strided_slice %55 {offsets = [2, 0], sizes = [1, 32], strides = [1, 1]} : vector<6x32xf32> to vector<1x32xf32>
    %59 = vector.extract_strided_slice %55 {offsets = [3, 0], sizes = [1, 32], strides = [1, 1]} : vector<6x32xf32> to vector<1x32xf32>
    %60 = vector.extract_strided_slice %55 {offsets = [4, 0], sizes = [1, 32], strides = [1, 1]} : vector<6x32xf32> to vector<1x32xf32>
    %61 = vector.extract_strided_slice %55 {offsets = [5, 0], sizes = [1, 32], strides = [1, 1]} : vector<6x32xf32> to vector<1x32xf32>
    %62 = arith.truncf %40 : vector<16x32xf32> to vector<16x32xbf16>
    %cst_36 = arith.constant dense<0.000000e+00> : vector<16x96xf32>
    %63 = tpu.matmul %62, %43, %cst_36 {dimension_numbers = #tpu.dot_dimension_numbers<[1], [0], [0], [1], [0, 0, 1, 1], [], []>} : vector<16x32xbf16>, vector<32x96xbf16>, vector<16x96xf32> -> vector<16x96xf32>
    %64 = vector.broadcast %45 : vector<1x96xf32> to vector<16x96xf32>
    %65 = arith.addf %63, %64 : vector<16x96xf32>
    %66 = vector.extract_strided_slice %65 {offsets = [0, 0], sizes = [16, 32], strides = [1, 1]} : vector<16x96xf32> to vector<16x32xf32>
    %67 = vector.extract_strided_slice %65 {offsets = [0, 32], sizes = [16, 32], strides = [1, 1]} : vector<16x96xf32> to vector<16x32xf32>
    %68 = vector.extract_strided_slice %65 {offsets = [0, 64], sizes = [16, 32], strides = [1, 1]} : vector<16x96xf32> to vector<16x32xf32>
    %69 = vector.extract_strided_slice %66 {offsets = [0, 0], sizes = [16, 16], strides = [1, 1]} : vector<16x32xf32> to vector<16x16xf32>
    %70 = vector.shape_cast %69 : vector<16x16xf32> to vector<2x8x16xf32>
    %71 = arith.truncf %70 : vector<2x8x16xf32> to vector<2x8x16xbf16>
    %72 = vector.extract_strided_slice %67 {offsets = [0, 0], sizes = [16, 16], strides = [1, 1]} : vector<16x32xf32> to vector<16x16xf32>
    %73 = vector.shape_cast %72 : vector<16x16xf32> to vector<2x8x16xf32>
    %74 = arith.truncf %73 : vector<2x8x16xf32> to vector<2x8x16xbf16>
    %75 = vector.extract_strided_slice %68 {offsets = [0, 0], sizes = [16, 16], strides = [1, 1]} : vector<16x32xf32> to vector<16x16xf32>
    %76 = vector.shape_cast %75 : vector<16x16xf32> to vector<2x8x16xf32>
    %77 = arith.truncf %76 : vector<2x8x16xf32> to vector<2x8x16xbf16>
    %cst_37 = arith.constant dense<0.000000e+00> : vector<2x8x8xf32>
    %78 = tpu.matmul %71, %74, %cst_37 {dimension_numbers = #tpu.dot_dimension_numbers<[2], [2], [1], [1], [0, 0, 0, 1, 1, 1], [0], [0]>} : vector<2x8x16xbf16>, vector<2x8x16xbf16>, vector<2x8x8xf32> -> vector<2x8x8xf32>
    %cst_38 = arith.constant 2.500000e-01 : f32
    %79 = vector.broadcast %cst_38 : f32 to vector<2x8x8xf32>
    %80 = arith.mulf %78, %79 : vector<2x8x8xf32>
    %81 = vector.broadcast %41 : vector<2x1x8xf32> to vector<2x8x8xf32>
    %82 = arith.addf %80, %81 : vector<2x8x8xf32>
    %cst_39 = arith.constant dense<0xFF800000> : vector<2x8xf32>
    %83 = vector.multi_reduction <maximumf>, %82, %cst_39 [2] : vector<2x8x8xf32> to vector<2x8xf32>
    %84 = vector.shape_cast %83 : vector<2x8xf32> to vector<2x8x1xf32>
    %85 = vector.broadcast %84 : vector<2x8x1xf32> to vector<2x8x8xf32>
    %86 = arith.subf %82, %85 : vector<2x8x8xf32>
    %87 = math.exp %86 : vector<2x8x8xf32>
    %cst_40 = arith.constant dense<0.000000e+00> : vector<2x8xf32>
    %88 = vector.multi_reduction <add>, %87, %cst_40 [2] : vector<2x8x8xf32> to vector<2x8xf32>
    %89 = vector.shape_cast %88 : vector<2x8xf32> to vector<2x8x1xf32>
    %90 = tpu.reciprocal %89 : vector<2x8x1xf32> -> vector<2x8x1xf32>
    %91 = vector.broadcast %90 : vector<2x8x1xf32> to vector<2x8x8xf32>
    %92 = arith.mulf %87, %91 : vector<2x8x8xf32>
    %93 = arith.truncf %92 : vector<2x8x8xf32> to vector<2x8x8xbf16>
    %cst_41 = arith.constant dense<0.000000e+00> : vector<2x8x16xf32>
    %94 = tpu.matmul %93, %77, %cst_41 {dimension_numbers = #tpu.dot_dimension_numbers<[2], [1], [1], [2], [0, 0, 0, 1, 1, 2], [0], [0]>} : vector<2x8x8xbf16>, vector<2x8x16xbf16>, vector<2x8x16xf32> -> vector<2x8x16xf32>
    %95 = vector.extract_strided_slice %66 {offsets = [0, 16], sizes = [16, 16], strides = [1, 1]} : vector<16x32xf32> to vector<16x16xf32>
    %96 = vector.shape_cast %95 : vector<16x16xf32> to vector<2x8x16xf32>
    %97 = arith.truncf %96 : vector<2x8x16xf32> to vector<2x8x16xbf16>
    %98 = vector.extract_strided_slice %67 {offsets = [0, 16], sizes = [16, 16], strides = [1, 1]} : vector<16x32xf32> to vector<16x16xf32>
    %99 = vector.shape_cast %98 : vector<16x16xf32> to vector<2x8x16xf32>
    %100 = arith.truncf %99 : vector<2x8x16xf32> to vector<2x8x16xbf16>
    %101 = vector.extract_strided_slice %68 {offsets = [0, 16], sizes = [16, 16], strides = [1, 1]} : vector<16x32xf32> to vector<16x16xf32>
    %102 = vector.shape_cast %101 : vector<16x16xf32> to vector<2x8x16xf32>
    %103 = arith.truncf %102 : vector<2x8x16xf32> to vector<2x8x16xbf16>
    %cst_42 = arith.constant dense<0.000000e+00> : vector<2x8x8xf32>
    %104 = tpu.matmul %97, %100, %cst_42 {dimension_numbers = #tpu.dot_dimension_numbers<[2], [2], [1], [1], [0, 0, 0, 1, 1, 1], [0], [0]>} : vector<2x8x16xbf16>, vector<2x8x16xbf16>, vector<2x8x8xf32> -> vector<2x8x8xf32>
    %cst_43 = arith.constant 2.500000e-01 : f32
    %105 = vector.broadcast %cst_43 : f32 to vector<2x8x8xf32>
    %106 = arith.mulf %104, %105 : vector<2x8x8xf32>
    %107 = vector.broadcast %41 : vector<2x1x8xf32> to vector<2x8x8xf32>
    %108 = arith.addf %106, %107 : vector<2x8x8xf32>
    %cst_44 = arith.constant dense<0xFF800000> : vector<2x8xf32>
    %109 = vector.multi_reduction <maximumf>, %108, %cst_44 [2] : vector<2x8x8xf32> to vector<2x8xf32>
    %110 = vector.shape_cast %109 : vector<2x8xf32> to vector<2x8x1xf32>
    %111 = vector.broadcast %110 : vector<2x8x1xf32> to vector<2x8x8xf32>
    %112 = arith.subf %108, %111 : vector<2x8x8xf32>
    %113 = math.exp %112 : vector<2x8x8xf32>
    %cst_45 = arith.constant dense<0.000000e+00> : vector<2x8xf32>
    %114 = vector.multi_reduction <add>, %113, %cst_45 [2] : vector<2x8x8xf32> to vector<2x8xf32>
    %115 = vector.shape_cast %114 : vector<2x8xf32> to vector<2x8x1xf32>
    %116 = tpu.reciprocal %115 : vector<2x8x1xf32> -> vector<2x8x1xf32>
    %117 = vector.broadcast %116 : vector<2x8x1xf32> to vector<2x8x8xf32>
    %118 = arith.mulf %113, %117 : vector<2x8x8xf32>
    %119 = arith.truncf %118 : vector<2x8x8xf32> to vector<2x8x8xbf16>
    %cst_46 = arith.constant dense<0.000000e+00> : vector<2x8x16xf32>
    %120 = tpu.matmul %119, %103, %cst_46 {dimension_numbers = #tpu.dot_dimension_numbers<[2], [1], [1], [2], [0, 0, 0, 1, 1, 2], [0], [0]>} : vector<2x8x8xbf16>, vector<2x8x16xbf16>, vector<2x8x16xf32> -> vector<2x8x16xf32>
    %121 = tpu.concatenate %94, %120 in 2 : vector<2x8x16xf32>, vector<2x8x16xf32> -> vector<2x8x32xf32>
    %122 = vector.shape_cast %121 : vector<2x8x32xf32> to vector<16x32xf32>
    %123 = arith.truncf %122 : vector<16x32xf32> to vector<16x32xbf16>
    %cst_47 = arith.constant dense<0.000000e+00> : vector<16x32xf32>
    %124 = tpu.matmul %123, %47, %cst_47 {dimension_numbers = #tpu.dot_dimension_numbers<[1], [0], [0], [1], [0, 0, 1, 1], [], []>} : vector<16x32xbf16>, vector<32x32xbf16>, vector<16x32xf32> -> vector<16x32xf32>
    %125 = vector.broadcast %56 : vector<1x32xf32> to vector<16x32xf32>
    %126 = arith.addf %124, %125 : vector<16x32xf32>
    %127 = arith.addf %40, %126 : vector<16x32xf32>
    %cst_48 = arith.constant dense<0.000000e+00> : vector<16xf32>
    %128 = vector.multi_reduction <add>, %127, %cst_48 [1] : vector<16x32xf32> to vector<16xf32>
    %129 = vector.shape_cast %128 : vector<16xf32> to vector<16x1xf32>
    %cst_49 = arith.constant 3.200000e+01 : f32
    %130 = vector.broadcast %cst_49 : f32 to vector<16x1xf32>
    %131 = arith.divf %129, %130 : vector<16x1xf32>
    %132 = vector.broadcast %131 : vector<16x1xf32> to vector<16x32xf32>
    %133 = arith.subf %127, %132 : vector<16x32xf32>
    %134 = arith.mulf %133, %133 : vector<16x32xf32>
    %cst_50 = arith.constant dense<0.000000e+00> : vector<16xf32>
    %135 = vector.multi_reduction <add>, %134, %cst_50 [1] : vector<16x32xf32> to vector<16xf32>
    %136 = vector.shape_cast %135 : vector<16xf32> to vector<16x1xf32>
    %cst_51 = arith.constant 3.200000e+01 : f32
    %137 = vector.broadcast %cst_51 : f32 to vector<16x1xf32>
    %138 = arith.divf %136, %137 : vector<16x1xf32>
    %139 = vector.broadcast %131 : vector<16x1xf32> to vector<16x32xf32>
    %140 = arith.subf %127, %139 : vector<16x32xf32>
    %cst_52 = arith.constant 9.99999996E-13 : f32
    %141 = vector.broadcast %cst_52 : f32 to vector<16x1xf32>
    %142 = arith.addf %138, %141 : vector<16x1xf32>
    %143 = math.rsqrt %142 : vector<16x1xf32>
    %144 = vector.broadcast %143 : vector<16x1xf32> to vector<16x32xf32>
    %145 = arith.mulf %140, %144 : vector<16x32xf32>
    %146 = vector.broadcast %57 : vector<1x32xf32> to vector<16x32xf32>
    %147 = arith.mulf %145, %146 : vector<16x32xf32>
    %148 = vector.broadcast %58 : vector<1x32xf32> to vector<16x32xf32>
    %149 = arith.addf %147, %148 : vector<16x32xf32>
    %150 = arith.truncf %149 : vector<16x32xf32> to vector<16x32xbf16>
    %cst_53 = arith.constant dense<0.000000e+00> : vector<16x64xf32>
    %151 = tpu.matmul %150, %49, %cst_53 {dimension_numbers = #tpu.dot_dimension_numbers<[1], [0], [0], [1], [0, 0, 1, 1], [], []>} : vector<16x32xbf16>, vector<32x64xbf16>, vector<16x64xf32> -> vector<16x64xf32>
    %152 = vector.broadcast %51 : vector<1x64xf32> to vector<16x64xf32>
    %153 = arith.addf %151, %152 : vector<16x64xf32>
    %154 = arith.mulf %153, %153 : vector<16x64xf32>
    %155 = arith.mulf %153, %154 : vector<16x64xf32>
    %cst_54 = arith.constant 4.471500e-02 : f32
    %156 = vector.broadcast %cst_54 : f32 to vector<16x64xf32>
    %157 = arith.mulf %156, %155 : vector<16x64xf32>
    %158 = arith.addf %153, %157 : vector<16x64xf32>
    %cst_55 = arith.constant 0.797884583 : f32
    %159 = vector.broadcast %cst_55 : f32 to vector<16x64xf32>
    %160 = arith.mulf %159, %158 : vector<16x64xf32>
    %161 = math.tanh %160 : vector<16x64xf32>
    %cst_56 = arith.constant 1.000000e+00 : f32
    %162 = vector.broadcast %cst_56 : f32 to vector<16x64xf32>
    %163 = arith.addf %162, %161 : vector<16x64xf32>
    %cst_57 = arith.constant 5.000000e-01 : f32
    %164 = vector.broadcast %cst_57 : f32 to vector<16x64xf32>
    %165 = arith.mulf %164, %163 : vector<16x64xf32>
    %166 = arith.mulf %153, %165 : vector<16x64xf32>
    %167 = arith.truncf %166 : vector<16x64xf32> to vector<16x64xbf16>
    %cst_58 = arith.constant dense<0.000000e+00> : vector<16x32xf32>
    %168 = tpu.matmul %167, %53, %cst_58 {dimension_numbers = #tpu.dot_dimension_numbers<[1], [0], [0], [1], [0, 0, 1, 1], [], []>} : vector<16x64xbf16>, vector<64x32xbf16>, vector<16x32xf32> -> vector<16x32xf32>
    %169 = vector.broadcast %59 : vector<1x32xf32> to vector<16x32xf32>
    %170 = arith.addf %168, %169 : vector<16x32xf32>
    %171 = arith.addf %149, %170 : vector<16x32xf32>
    %cst_59 = arith.constant dense<0.000000e+00> : vector<16xf32>
    %172 = vector.multi_reduction <add>, %171, %cst_59 [1] : vector<16x32xf32> to vector<16xf32>
    %173 = vector.shape_cast %172 : vector<16xf32> to vector<16x1xf32>
    %cst_60 = arith.constant 3.200000e+01 : f32
    %174 = vector.broadcast %cst_60 : f32 to vector<16x1xf32>
    %175 = arith.divf %173, %174 : vector<16x1xf32>
    %176 = vector.broadcast %175 : vector<16x1xf32> to vector<16x32xf32>
    %177 = arith.subf %171, %176 : vector<16x32xf32>
    %178 = arith.mulf %177, %177 : vector<16x32xf32>
    %cst_61 = arith.constant dense<0.000000e+00> : vector<16xf32>
    %179 = vector.multi_reduction <add>, %178, %cst_61 [1] : vector<16x32xf32> to vector<16xf32>
    %180 = vector.shape_cast %179 : vector<16xf32> to vector<16x1xf32>
    %cst_62 = arith.constant 3.200000e+01 : f32
    %181 = vector.broadcast %cst_62 : f32 to vector<16x1xf32>
    %182 = arith.divf %180, %181 : vector<16x1xf32>
    %183 = vector.broadcast %175 : vector<16x1xf32> to vector<16x32xf32>
    %184 = arith.subf %171, %183 : vector<16x32xf32>
    %cst_63 = arith.constant 9.99999996E-13 : f32
    %185 = vector.broadcast %cst_63 : f32 to vector<16x1xf32>
    %186 = arith.addf %182, %185 : vector<16x1xf32>
    %187 = math.rsqrt %186 : vector<16x1xf32>
    %188 = vector.broadcast %187 : vector<16x1xf32> to vector<16x32xf32>
    %189 = arith.mulf %184, %188 : vector<16x32xf32>
    %190 = vector.broadcast %60 : vector<1x32xf32> to vector<16x32xf32>
    %191 = arith.mulf %189, %190 : vector<16x32xf32>
    %192 = vector.broadcast %61 : vector<1x32xf32> to vector<16x32xf32>
    %193 = arith.addf %191, %192 : vector<16x32xf32>
    %c1 = arith.constant 1 : index
    %c0_64 = arith.constant 0 : index
    %c0_65 = arith.constant 0 : index
    %194 = vector.load %arg6[%c1, %c0_64, %c0_65] : memref<2x32x96xbf16, #tpu.memory_space<vmem>>, vector<1x32x96xbf16>
    %195 = vector.shape_cast %194 : vector<1x32x96xbf16> to vector<32x96xbf16>
    %c1_66 = arith.constant 1 : index
    %c0_67 = arith.constant 0 : index
    %c0_68 = arith.constant 0 : index
    %196 = vector.load %arg7[%c1_66, %c0_67, %c0_68] : memref<2x1x96xf32, #tpu.memory_space<vmem>>, vector<1x1x96xf32>
    %197 = vector.shape_cast %196 : vector<1x1x96xf32> to vector<1x96xf32>
    %c1_69 = arith.constant 1 : index
    %c0_70 = arith.constant 0 : index
    %c0_71 = arith.constant 0 : index
    %198 = vector.load %arg8[%c1_69, %c0_70, %c0_71] : memref<2x32x32xbf16, #tpu.memory_space<vmem>>, vector<1x32x32xbf16>
    %199 = vector.shape_cast %198 : vector<1x32x32xbf16> to vector<32x32xbf16>
    %c1_72 = arith.constant 1 : index
    %c0_73 = arith.constant 0 : index
    %c0_74 = arith.constant 0 : index
    %200 = vector.load %arg9[%c1_72, %c0_73, %c0_74] : memref<2x32x64xbf16, #tpu.memory_space<vmem>>, vector<1x32x64xbf16>
    %201 = vector.shape_cast %200 : vector<1x32x64xbf16> to vector<32x64xbf16>
    %c1_75 = arith.constant 1 : index
    %c0_76 = arith.constant 0 : index
    %c0_77 = arith.constant 0 : index
    %202 = vector.load %arg10[%c1_75, %c0_76, %c0_77] : memref<2x1x64xf32, #tpu.memory_space<vmem>>, vector<1x1x64xf32>
    %203 = vector.shape_cast %202 : vector<1x1x64xf32> to vector<1x64xf32>
    %c1_78 = arith.constant 1 : index
    %c0_79 = arith.constant 0 : index
    %c0_80 = arith.constant 0 : index
    %204 = vector.load %arg11[%c1_78, %c0_79, %c0_80] : memref<2x64x32xbf16, #tpu.memory_space<vmem>>, vector<1x64x32xbf16>
    %205 = vector.shape_cast %204 : vector<1x64x32xbf16> to vector<64x32xbf16>
    %c1_81 = arith.constant 1 : index
    %c0_82 = arith.constant 0 : index
    %c0_83 = arith.constant 0 : index
    %206 = vector.load %arg12[%c1_81, %c0_82, %c0_83] : memref<2x6x32xf32, #tpu.memory_space<vmem>>, vector<1x6x32xf32>
    %207 = vector.shape_cast %206 : vector<1x6x32xf32> to vector<6x32xf32>
    %208 = vector.extract_strided_slice %207 {offsets = [0, 0], sizes = [1, 32], strides = [1, 1]} : vector<6x32xf32> to vector<1x32xf32>
    %209 = vector.extract_strided_slice %207 {offsets = [1, 0], sizes = [1, 32], strides = [1, 1]} : vector<6x32xf32> to vector<1x32xf32>
    %210 = vector.extract_strided_slice %207 {offsets = [2, 0], sizes = [1, 32], strides = [1, 1]} : vector<6x32xf32> to vector<1x32xf32>
    %211 = vector.extract_strided_slice %207 {offsets = [3, 0], sizes = [1, 32], strides = [1, 1]} : vector<6x32xf32> to vector<1x32xf32>
    %212 = vector.extract_strided_slice %207 {offsets = [4, 0], sizes = [1, 32], strides = [1, 1]} : vector<6x32xf32> to vector<1x32xf32>
    %213 = vector.extract_strided_slice %207 {offsets = [5, 0], sizes = [1, 32], strides = [1, 1]} : vector<6x32xf32> to vector<1x32xf32>
    %214 = arith.truncf %193 : vector<16x32xf32> to vector<16x32xbf16>
    %cst_84 = arith.constant dense<0.000000e+00> : vector<16x96xf32>
    %215 = tpu.matmul %214, %195, %cst_84 {dimension_numbers = #tpu.dot_dimension_numbers<[1], [0], [0], [1], [0, 0, 1, 1], [], []>} : vector<16x32xbf16>, vector<32x96xbf16>, vector<16x96xf32> -> vector<16x96xf32>
    %216 = vector.broadcast %197 : vector<1x96xf32> to vector<16x96xf32>
    %217 = arith.addf %215, %216 : vector<16x96xf32>
    %218 = vector.extract_strided_slice %217 {offsets = [0, 0], sizes = [16, 32], strides = [1, 1]} : vector<16x96xf32> to vector<16x32xf32>
    %219 = vector.extract_strided_slice %217 {offsets = [0, 32], sizes = [16, 32], strides = [1, 1]} : vector<16x96xf32> to vector<16x32xf32>
    %220 = vector.extract_strided_slice %217 {offsets = [0, 64], sizes = [16, 32], strides = [1, 1]} : vector<16x96xf32> to vector<16x32xf32>
    %221 = vector.extract_strided_slice %218 {offsets = [0, 0], sizes = [16, 16], strides = [1, 1]} : vector<16x32xf32> to vector<16x16xf32>
    %222 = vector.shape_cast %221 : vector<16x16xf32> to vector<2x8x16xf32>
    %223 = arith.truncf %222 : vector<2x8x16xf32> to vector<2x8x16xbf16>
    %224 = vector.extract_strided_slice %219 {offsets = [0, 0], sizes = [16, 16], strides = [1, 1]} : vector<16x32xf32> to vector<16x16xf32>
    %225 = vector.shape_cast %224 : vector<16x16xf32> to vector<2x8x16xf32>
    %226 = arith.truncf %225 : vector<2x8x16xf32> to vector<2x8x16xbf16>
    %227 = vector.extract_strided_slice %220 {offsets = [0, 0], sizes = [16, 16], strides = [1, 1]} : vector<16x32xf32> to vector<16x16xf32>
    %228 = vector.shape_cast %227 : vector<16x16xf32> to vector<2x8x16xf32>
    %229 = arith.truncf %228 : vector<2x8x16xf32> to vector<2x8x16xbf16>
    %cst_85 = arith.constant dense<0.000000e+00> : vector<2x8x8xf32>
    %230 = tpu.matmul %223, %226, %cst_85 {dimension_numbers = #tpu.dot_dimension_numbers<[2], [2], [1], [1], [0, 0, 0, 1, 1, 1], [0], [0]>} : vector<2x8x16xbf16>, vector<2x8x16xbf16>, vector<2x8x8xf32> -> vector<2x8x8xf32>
    %cst_86 = arith.constant 2.500000e-01 : f32
    %231 = vector.broadcast %cst_86 : f32 to vector<2x8x8xf32>
    %232 = arith.mulf %230, %231 : vector<2x8x8xf32>
    %233 = vector.broadcast %41 : vector<2x1x8xf32> to vector<2x8x8xf32>
    %234 = arith.addf %232, %233 : vector<2x8x8xf32>
    %cst_87 = arith.constant dense<0xFF800000> : vector<2x8xf32>
    %235 = vector.multi_reduction <maximumf>, %234, %cst_87 [2] : vector<2x8x8xf32> to vector<2x8xf32>
    %236 = vector.shape_cast %235 : vector<2x8xf32> to vector<2x8x1xf32>
    %237 = vector.broadcast %236 : vector<2x8x1xf32> to vector<2x8x8xf32>
    %238 = arith.subf %234, %237 : vector<2x8x8xf32>
    %239 = math.exp %238 : vector<2x8x8xf32>
    %cst_88 = arith.constant dense<0.000000e+00> : vector<2x8xf32>
    %240 = vector.multi_reduction <add>, %239, %cst_88 [2] : vector<2x8x8xf32> to vector<2x8xf32>
    %241 = vector.shape_cast %240 : vector<2x8xf32> to vector<2x8x1xf32>
    %242 = tpu.reciprocal %241 : vector<2x8x1xf32> -> vector<2x8x1xf32>
    %243 = vector.broadcast %242 : vector<2x8x1xf32> to vector<2x8x8xf32>
    %244 = arith.mulf %239, %243 : vector<2x8x8xf32>
    %245 = arith.truncf %244 : vector<2x8x8xf32> to vector<2x8x8xbf16>
    %cst_89 = arith.constant dense<0.000000e+00> : vector<2x8x16xf32>
    %246 = tpu.matmul %245, %229, %cst_89 {dimension_numbers = #tpu.dot_dimension_numbers<[2], [1], [1], [2], [0, 0, 0, 1, 1, 2], [0], [0]>} : vector<2x8x8xbf16>, vector<2x8x16xbf16>, vector<2x8x16xf32> -> vector<2x8x16xf32>
    %247 = vector.extract_strided_slice %218 {offsets = [0, 16], sizes = [16, 16], strides = [1, 1]} : vector<16x32xf32> to vector<16x16xf32>
    %248 = vector.shape_cast %247 : vector<16x16xf32> to vector<2x8x16xf32>
    %249 = arith.truncf %248 : vector<2x8x16xf32> to vector<2x8x16xbf16>
    %250 = vector.extract_strided_slice %219 {offsets = [0, 16], sizes = [16, 16], strides = [1, 1]} : vector<16x32xf32> to vector<16x16xf32>
    %251 = vector.shape_cast %250 : vector<16x16xf32> to vector<2x8x16xf32>
    %252 = arith.truncf %251 : vector<2x8x16xf32> to vector<2x8x16xbf16>
    %253 = vector.extract_strided_slice %220 {offsets = [0, 16], sizes = [16, 16], strides = [1, 1]} : vector<16x32xf32> to vector<16x16xf32>
    %254 = vector.shape_cast %253 : vector<16x16xf32> to vector<2x8x16xf32>
    %255 = arith.truncf %254 : vector<2x8x16xf32> to vector<2x8x16xbf16>
    %cst_90 = arith.constant dense<0.000000e+00> : vector<2x8x8xf32>
    %256 = tpu.matmul %249, %252, %cst_90 {dimension_numbers = #tpu.dot_dimension_numbers<[2], [2], [1], [1], [0, 0, 0, 1, 1, 1], [0], [0]>} : vector<2x8x16xbf16>, vector<2x8x16xbf16>, vector<2x8x8xf32> -> vector<2x8x8xf32>
    %cst_91 = arith.constant 2.500000e-01 : f32
    %257 = vector.broadcast %cst_91 : f32 to vector<2x8x8xf32>
    %258 = arith.mulf %256, %257 : vector<2x8x8xf32>
    %259 = vector.broadcast %41 : vector<2x1x8xf32> to vector<2x8x8xf32>
    %260 = arith.addf %258, %259 : vector<2x8x8xf32>
    %cst_92 = arith.constant dense<0xFF800000> : vector<2x8xf32>
    %261 = vector.multi_reduction <maximumf>, %260, %cst_92 [2] : vector<2x8x8xf32> to vector<2x8xf32>
    %262 = vector.shape_cast %261 : vector<2x8xf32> to vector<2x8x1xf32>
    %263 = vector.broadcast %262 : vector<2x8x1xf32> to vector<2x8x8xf32>
    %264 = arith.subf %260, %263 : vector<2x8x8xf32>
    %265 = math.exp %264 : vector<2x8x8xf32>
    %cst_93 = arith.constant dense<0.000000e+00> : vector<2x8xf32>
    %266 = vector.multi_reduction <add>, %265, %cst_93 [2] : vector<2x8x8xf32> to vector<2x8xf32>
    %267 = vector.shape_cast %266 : vector<2x8xf32> to vector<2x8x1xf32>
    %268 = tpu.reciprocal %267 : vector<2x8x1xf32> -> vector<2x8x1xf32>
    %269 = vector.broadcast %268 : vector<2x8x1xf32> to vector<2x8x8xf32>
    %270 = arith.mulf %265, %269 : vector<2x8x8xf32>
    %271 = arith.truncf %270 : vector<2x8x8xf32> to vector<2x8x8xbf16>
    %cst_94 = arith.constant dense<0.000000e+00> : vector<2x8x16xf32>
    %272 = tpu.matmul %271, %255, %cst_94 {dimension_numbers = #tpu.dot_dimension_numbers<[2], [1], [1], [2], [0, 0, 0, 1, 1, 2], [0], [0]>} : vector<2x8x8xbf16>, vector<2x8x16xbf16>, vector<2x8x16xf32> -> vector<2x8x16xf32>
    %273 = tpu.concatenate %246, %272 in 2 : vector<2x8x16xf32>, vector<2x8x16xf32> -> vector<2x8x32xf32>
    %274 = vector.shape_cast %273 : vector<2x8x32xf32> to vector<16x32xf32>
    %275 = arith.truncf %274 : vector<16x32xf32> to vector<16x32xbf16>
    %cst_95 = arith.constant dense<0.000000e+00> : vector<16x32xf32>
    %276 = tpu.matmul %275, %199, %cst_95 {dimension_numbers = #tpu.dot_dimension_numbers<[1], [0], [0], [1], [0, 0, 1, 1], [], []>} : vector<16x32xbf16>, vector<32x32xbf16>, vector<16x32xf32> -> vector<16x32xf32>
    %277 = vector.broadcast %208 : vector<1x32xf32> to vector<16x32xf32>
    %278 = arith.addf %276, %277 : vector<16x32xf32>
    %279 = arith.addf %193, %278 : vector<16x32xf32>
    %cst_96 = arith.constant dense<0.000000e+00> : vector<16xf32>
    %280 = vector.multi_reduction <add>, %279, %cst_96 [1] : vector<16x32xf32> to vector<16xf32>
    %281 = vector.shape_cast %280 : vector<16xf32> to vector<16x1xf32>
    %cst_97 = arith.constant 3.200000e+01 : f32
    %282 = vector.broadcast %cst_97 : f32 to vector<16x1xf32>
    %283 = arith.divf %281, %282 : vector<16x1xf32>
    %284 = vector.broadcast %283 : vector<16x1xf32> to vector<16x32xf32>
    %285 = arith.subf %279, %284 : vector<16x32xf32>
    %286 = arith.mulf %285, %285 : vector<16x32xf32>
    %cst_98 = arith.constant dense<0.000000e+00> : vector<16xf32>
    %287 = vector.multi_reduction <add>, %286, %cst_98 [1] : vector<16x32xf32> to vector<16xf32>
    %288 = vector.shape_cast %287 : vector<16xf32> to vector<16x1xf32>
    %cst_99 = arith.constant 3.200000e+01 : f32
    %289 = vector.broadcast %cst_99 : f32 to vector<16x1xf32>
    %290 = arith.divf %288, %289 : vector<16x1xf32>
    %291 = vector.broadcast %283 : vector<16x1xf32> to vector<16x32xf32>
    %292 = arith.subf %279, %291 : vector<16x32xf32>
    %cst_100 = arith.constant 9.99999996E-13 : f32
    %293 = vector.broadcast %cst_100 : f32 to vector<16x1xf32>
    %294 = arith.addf %290, %293 : vector<16x1xf32>
    %295 = math.rsqrt %294 : vector<16x1xf32>
    %296 = vector.broadcast %295 : vector<16x1xf32> to vector<16x32xf32>
    %297 = arith.mulf %292, %296 : vector<16x32xf32>
    %298 = vector.broadcast %209 : vector<1x32xf32> to vector<16x32xf32>
    %299 = arith.mulf %297, %298 : vector<16x32xf32>
    %300 = vector.broadcast %210 : vector<1x32xf32> to vector<16x32xf32>
    %301 = arith.addf %299, %300 : vector<16x32xf32>
    %302 = arith.truncf %301 : vector<16x32xf32> to vector<16x32xbf16>
    %cst_101 = arith.constant dense<0.000000e+00> : vector<16x64xf32>
    %303 = tpu.matmul %302, %201, %cst_101 {dimension_numbers = #tpu.dot_dimension_numbers<[1], [0], [0], [1], [0, 0, 1, 1], [], []>} : vector<16x32xbf16>, vector<32x64xbf16>, vector<16x64xf32> -> vector<16x64xf32>
    %304 = vector.broadcast %203 : vector<1x64xf32> to vector<16x64xf32>
    %305 = arith.addf %303, %304 : vector<16x64xf32>
    %306 = arith.mulf %305, %305 : vector<16x64xf32>
    %307 = arith.mulf %305, %306 : vector<16x64xf32>
    %cst_102 = arith.constant 4.471500e-02 : f32
    %308 = vector.broadcast %cst_102 : f32 to vector<16x64xf32>
    %309 = arith.mulf %308, %307 : vector<16x64xf32>
    %310 = arith.addf %305, %309 : vector<16x64xf32>
    %cst_103 = arith.constant 0.797884583 : f32
    %311 = vector.broadcast %cst_103 : f32 to vector<16x64xf32>
    %312 = arith.mulf %311, %310 : vector<16x64xf32>
    %313 = math.tanh %312 : vector<16x64xf32>
    %cst_104 = arith.constant 1.000000e+00 : f32
    %314 = vector.broadcast %cst_104 : f32 to vector<16x64xf32>
    %315 = arith.addf %314, %313 : vector<16x64xf32>
    %cst_105 = arith.constant 5.000000e-01 : f32
    %316 = vector.broadcast %cst_105 : f32 to vector<16x64xf32>
    %317 = arith.mulf %316, %315 : vector<16x64xf32>
    %318 = arith.mulf %305, %317 : vector<16x64xf32>
    %319 = arith.truncf %318 : vector<16x64xf32> to vector<16x64xbf16>
    %cst_106 = arith.constant dense<0.000000e+00> : vector<16x32xf32>
    %320 = tpu.matmul %319, %205, %cst_106 {dimension_numbers = #tpu.dot_dimension_numbers<[1], [0], [0], [1], [0, 0, 1, 1], [], []>} : vector<16x64xbf16>, vector<64x32xbf16>, vector<16x32xf32> -> vector<16x32xf32>
    %321 = vector.broadcast %211 : vector<1x32xf32> to vector<16x32xf32>
    %322 = arith.addf %320, %321 : vector<16x32xf32>
    %323 = arith.addf %301, %322 : vector<16x32xf32>
    %cst_107 = arith.constant dense<0.000000e+00> : vector<16xf32>
    %324 = vector.multi_reduction <add>, %323, %cst_107 [1] : vector<16x32xf32> to vector<16xf32>
    %325 = vector.shape_cast %324 : vector<16xf32> to vector<16x1xf32>
    %cst_108 = arith.constant 3.200000e+01 : f32
    %326 = vector.broadcast %cst_108 : f32 to vector<16x1xf32>
    %327 = arith.divf %325, %326 : vector<16x1xf32>
    %328 = vector.broadcast %327 : vector<16x1xf32> to vector<16x32xf32>
    %329 = arith.subf %323, %328 : vector<16x32xf32>
    %330 = arith.mulf %329, %329 : vector<16x32xf32>
    %cst_109 = arith.constant dense<0.000000e+00> : vector<16xf32>
    %331 = vector.multi_reduction <add>, %330, %cst_109 [1] : vector<16x32xf32> to vector<16xf32>
    %332 = vector.shape_cast %331 : vector<16xf32> to vector<16x1xf32>
    %cst_110 = arith.constant 3.200000e+01 : f32
    %333 = vector.broadcast %cst_110 : f32 to vector<16x1xf32>
    %334 = arith.divf %332, %333 : vector<16x1xf32>
    %335 = vector.broadcast %327 : vector<16x1xf32> to vector<16x32xf32>
    %336 = arith.subf %323, %335 : vector<16x32xf32>
    %cst_111 = arith.constant 9.99999996E-13 : f32
    %337 = vector.broadcast %cst_111 : f32 to vector<16x1xf32>
    %338 = arith.addf %334, %337 : vector<16x1xf32>
    %339 = math.rsqrt %338 : vector<16x1xf32>
    %340 = vector.broadcast %339 : vector<16x1xf32> to vector<16x32xf32>
    %341 = arith.mulf %336, %340 : vector<16x32xf32>
    %342 = vector.broadcast %212 : vector<1x32xf32> to vector<16x32xf32>
    %343 = arith.mulf %341, %342 : vector<16x32xf32>
    %344 = vector.broadcast %213 : vector<1x32xf32> to vector<16x32xf32>
    %345 = arith.addf %343, %344 : vector<16x32xf32>
    %346 = vector.shape_cast %345 : vector<16x32xf32> to vector<2x8x32xf32>
    %347 = vector.extract_strided_slice %346 {offsets = [0, 0, 0], sizes = [2, 1, 32], strides = [1, 1, 1]} : vector<2x8x32xf32> to vector<2x1x32xf32>
    %348 = vector.shape_cast %347 : vector<2x1x32xf32> to vector<2x32xf32>
    %349 = vector.extract_strided_slice %346 {offsets = [0, 1, 0], sizes = [2, 1, 32], strides = [1, 1, 1]} : vector<2x8x32xf32> to vector<2x1x32xf32>
    %350 = vector.shape_cast %349 : vector<2x1x32xf32> to vector<2x32xf32>
    %351 = vector.extract_strided_slice %346 {offsets = [0, 2, 0], sizes = [2, 1, 32], strides = [1, 1, 1]} : vector<2x8x32xf32> to vector<2x1x32xf32>
    %352 = vector.shape_cast %351 : vector<2x1x32xf32> to vector<2x32xf32>
    %353 = vector.extract_strided_slice %346 {offsets = [0, 3, 0], sizes = [2, 1, 32], strides = [1, 1, 1]} : vector<2x8x32xf32> to vector<2x1x32xf32>
    %354 = vector.shape_cast %353 : vector<2x1x32xf32> to vector<2x32xf32>
    %355 = vector.extract_strided_slice %346 {offsets = [0, 4, 0], sizes = [2, 1, 32], strides = [1, 1, 1]} : vector<2x8x32xf32> to vector<2x1x32xf32>
    %356 = vector.shape_cast %355 : vector<2x1x32xf32> to vector<2x32xf32>
    %357 = vector.extract_strided_slice %346 {offsets = [0, 5, 0], sizes = [2, 1, 32], strides = [1, 1, 1]} : vector<2x8x32xf32> to vector<2x1x32xf32>
    %358 = vector.shape_cast %357 : vector<2x1x32xf32> to vector<2x32xf32>
    %359 = vector.extract_strided_slice %346 {offsets = [0, 6, 0], sizes = [2, 1, 32], strides = [1, 1, 1]} : vector<2x8x32xf32> to vector<2x1x32xf32>
    %360 = vector.shape_cast %359 : vector<2x1x32xf32> to vector<2x32xf32>
    %361 = vector.extract_strided_slice %346 {offsets = [0, 7, 0], sizes = [2, 1, 32], strides = [1, 1, 1]} : vector<2x8x32xf32> to vector<2x1x32xf32>
    %362 = vector.shape_cast %361 : vector<2x1x32xf32> to vector<2x32xf32>
    %363 = tpu.concatenate %348, %350, %352, %354, %356, %358, %360, %362 in 1 : vector<2x32xf32>, vector<2x32xf32>, vector<2x32xf32>, vector<2x32xf32>, vector<2x32xf32>, vector<2x32xf32>, vector<2x32xf32>, vector<2x32xf32> -> vector<2x256xf32>
    %c0_112 = arith.constant 0 : index
    %c0_113 = arith.constant 0 : index
    %364 = vector.load %arg13[%c0_112, %c0_113] : memref<2x256xf32, #tpu.memory_space<vmem>>, vector<2x256xf32>
    tpu.vector_store %arg13[%c0_112, %c0_113], %363 {strides = array<i32>} : memref<2x256xf32, #tpu.memory_space<vmem>>, vector<2x256xf32>,
    return
  }
  func.func @transform_0(%arg0: i32) -> (i32, i32) {
    %c0_i32 = arith.constant 0 : i32
    %c0_i32_0 = arith.constant 0 : i32
    %c0_i32_1 = arith.constant 0 : i32
    return %c0_i32, %c0_i32_0 : i32, i32
  }
  func.func @transform_1(%arg0: i32) -> (i32, i32, i32) {
    %c0_i32 = arith.constant 0 : i32
    %c0_i32_0 = arith.constant 0 : i32
    %c0_i32_1 = arith.constant 0 : i32
    %c0_i32_2 = arith.constant 0 : i32
    return %c0_i32, %c0_i32_0, %c0_i32_1 : i32, i32, i32
  }
  func.func @transform_2(%arg0: i32) -> (i32, i32) {
    %c0_i32 = arith.constant 0 : i32
    %c0_i32_0 = arith.constant 0 : i32
    %c0_i32_1 = arith.constant 0 : i32
    return %c0_i32, %c0_i32_0 : i32, i32
  }
  func.func @transform_3(%arg0: i32) -> (i32, i32) {
    %c0_i32 = arith.constant 0 : i32
    %c0_i32_0 = arith.constant 0 : i32
    %c0_i32_1 = arith.constant 0 : i32
    return %c0_i32, %c0_i32_0 : i32, i32
  }
  func.func @transform_4(%arg0: i32) -> (i32, i32) {
    %c0_i32 = arith.constant 0 : i32
    %c0_i32_0 = arith.constant 0 : i32
    %c0_i32_1 = arith.constant 0 : i32
    return %c0_i32, %c0_i32_0 : i32, i32
  }
  func.func @transform_5(%arg0: i32) -> (i32, i32, i32) {
    %c0_i32 = arith.constant 0 : i32
    %c0_i32_0 = arith.constant 0 : i32
    %c0_i32_1 = arith.constant 0 : i32
    %c0_i32_2 = arith.constant 0 : i32
    return %c0_i32, %c0_i32_0, %c0_i32_1 : i32, i32, i32
  }
  func.func @transform_6(%arg0: i32) -> (i32, i32, i32) {
    %c0_i32 = arith.constant 0 : i32
    %c0_i32_0 = arith.constant 0 : i32
    %c0_i32_1 = arith.constant 0 : i32
    %c0_i32_2 = arith.constant 0 : i32
    return %c0_i32, %c0_i32_0, %c0_i32_1 : i32, i32, i32
  }
  func.func @transform_7(%arg0: i32) -> (i32, i32, i32) {
    %c0_i32 = arith.constant 0 : i32
    %c0_i32_0 = arith.constant 0 : i32
    %c0_i32_1 = arith.constant 0 : i32
    %c0_i32_2 = arith.constant 0 : i32
    return %c0_i32, %c0_i32_0, %c0_i32_1 : i32, i32, i32
  }
  func.func @transform_8(%arg0: i32) -> (i32, i32, i32) {
    %c0_i32 = arith.constant 0 : i32
    %c0_i32_0 = arith.constant 0 : i32
    %c0_i32_1 = arith.constant 0 : i32
    %c0_i32_2 = arith.constant 0 : i32
    return %c0_i32, %c0_i32_0, %c0_i32_1 : i32, i32, i32
  }
  func.func @transform_9(%arg0: i32) -> (i32, i32, i32) {
    %c0_i32 = arith.constant 0 : i32
    %c0_i32_0 = arith.constant 0 : i32
    %c0_i32_1 = arith.constant 0 : i32
    %c0_i32_2 = arith.constant 0 : i32
    return %c0_i32, %c0_i32_0, %c0_i32_1 : i32, i32, i32
  }
  func.func @transform_10(%arg0: i32) -> (i32, i32, i32) {
    %c0_i32 = arith.constant 0 : i32
    %c0_i32_0 = arith.constant 0 : i32
    %c0_i32_1 = arith.constant 0 : i32
    %c0_i32_2 = arith.constant 0 : i32
    return %c0_i32, %c0_i32_0, %c0_i32_1 : i32, i32, i32
  }
  func.func @transform_11(%arg0: i32) -> (i32, i32, i32) {
    %c0_i32 = arith.constant 0 : i32
    %c0_i32_0 = arith.constant 0 : i32
    %c0_i32_1 = arith.constant 0 : i32
    %c0_i32_2 = arith.constant 0 : i32
    return %c0_i32, %c0_i32_0, %c0_i32_1 : i32, i32, i32
  }
  func.func @transform_12(%arg0: i32) -> (i32, i32) {
    %c0_i32 = arith.constant 0 : i32
    %c0_i32_0 = arith.constant 0 : i32
    %c0_i32_1 = arith.constant 0 : i32
    return %c0_i32, %c0_i32_0 : i32, i32
  }
}

</mosaic_0001>

<llo_original>
// kernel: tpu_custom_call.1
$region0: #{tpu_custom_call.1}
  #allocation0 [shape = 'u32[]', space=smem, size = 0x4, offset = 0x4, fixed_abs, tag = 'smem constant byte address 0x4 - core index']
  #allocation1 [shape = 'u32[144,128]{1,0:T(1,128)}', space=vmem, size = 0x12000, scoped, tag = 'internal scratch']
  %s0 = inlined_call_operand.vmem [shape: s32[2,8], index: 0, kind: input, shape index: {}]
  %s1 = inlined_call_operand.vmem [shape: f32[2,1,8], index: 1, kind: input, shape index: {}]
  %s2 = inlined_call_operand.vmem [shape: f32[8,32], index: 2, kind: input, shape index: {}]
  %s3 = inlined_call_operand.vmem [shape: f32[64,32], index: 3, kind: input, shape index: {}]
  %s4 = inlined_call_operand.vmem [shape: f32[2,32], index: 4, kind: input, shape index: {}]
  %s5 = inlined_call_operand.vmem [shape: bf16[2,32,96], index: 5, kind: input, shape index: {}]
  %s6 = inlined_call_operand.vmem [shape: f32[2,1,96], index: 6, kind: input, shape index: {}]
  %s7 = inlined_call_operand.vmem [shape: bf16[2,32,32], index: 7, kind: input, shape index: {}]
  %s8 = inlined_call_operand.vmem [shape: bf16[2,32,64], index: 8, kind: input, shape index: {}]
  %s9 = inlined_call_operand.vmem [shape: f32[2,1,64], index: 9, kind: input, shape index: {}]
  %s10 = inlined_call_operand.vmem [shape: bf16[2,64,32], index: 10, kind: input, shape index: {}]
  %s11 = inlined_call_operand.vmem [shape: f32[2,6,32], index: 11, kind: input, shape index: {}]
  %s12 = inlined_call_operand.hbm [shape: f32[2,256], index: 12, kind: output, shape index: {}]
  %s13 = sld [smem:[#allocation0]]
  $region58: #{tpu_custom_call.1} parent=0
    _
  %s15 = ssub.s32 1, %s13
  %s16 = scalar_select 0, %s15, %s13
  $region1: #{tpu_custom_call.1} parent=0
    #allocation2 [shape = 'u8[2048]{0}', space=vmem, size = 0x800, scoped, tag = 'output window, operand 0, single buffered']
    #allocation3 [shape = 's32[1]{0}', space=sflag, size = 0x4, scoped, tag = 'scoped memory for tpu_custom_call.1']
    %17 = vsyncpa [#allocation3], 0
    // Predicated region
    $region2: #{tpu_custom_call.1} parent=1 // pred_check
      _
    $region3: #{tpu_custom_call.1} parent=1 // pred_check_branch
      %19 = sbr.rel (0) target = $region5
    $region4: #{tpu_custom_call.1} parent=1 // pred_region
      _
    $region5: #{tpu_custom_call.1} parent=1 // pred_fallthru
      _
    // Predicated region
    $region6: #{tpu_custom_call.1} parent=1 // pred_check
      _
    $region7: #{tpu_custom_call.1} parent=1 // pred_check_branch
      %21 = sbr.rel (0) target = $region9
    $region8: #{tpu_custom_call.1} parent=1 // pred_region
      _
    $region9: #{tpu_custom_call.1} parent=1 // pred_fallthru
      _
    // Predicated region
    $region10: #{tpu_custom_call.1} parent=1 // pred_check
      _
    $region11: #{tpu_custom_call.1} parent=1 // pred_check_branch
      %23 = sbr.rel (0) target = $region13
    $region12: #{tpu_custom_call.1} parent=1 // pred_region
      _
    $region13: #{tpu_custom_call.1} parent=1 // pred_fallthru
      _
    // Predicated region
    $region14: #{tpu_custom_call.1} parent=1 // pred_check
      _
    $region15: #{tpu_custom_call.1} parent=1 // pred_check_branch
      %25 = sbr.rel (0) target = $region17
    $region16: #{tpu_custom_call.1} parent=1 // pred_region
      _
    $region17: #{tpu_custom_call.1} parent=1 // pred_fallthru
      _
    // Predicated region
    $region18: #{tpu_custom_call.1} parent=1 // pred_check
      _
    $region19: #{tpu_custom_call.1} parent=1 // pred_check_branch
      %27 = sbr.rel (0) target = $region21
    $region20: #{tpu_custom_call.1} parent=1 // pred_region
      _
    $region21: #{tpu_custom_call.1} parent=1 // pred_fallthru
      _
    // Predicated region
    $region22: #{tpu_custom_call.1} parent=1 // pred_check
      _
    $region23: #{tpu_custom_call.1} parent=1 // pred_check_branch
      %29 = sbr.rel (0) target = $region25
    $region24: #{tpu_custom_call.1} parent=1 // pred_region
      _
    $region25: #{tpu_custom_call.1} parent=1 // pred_fallthru
      _
    // Predicated region
    $region26: #{tpu_custom_call.1} parent=1 // pred_check
      _
    $region27: #{tpu_custom_call.1} parent=1 // pred_check_branch
      %31 = sbr.rel (0) target = $region29
    $region28: #{tpu_custom_call.1} parent=1 // pred_region
      _
    $region29: #{tpu_custom_call.1} parent=1 // pred_fallthru
      _
    // Predicated region
    $region30: #{tpu_custom_call.1} parent=1 // pred_check
      _
    $region31: #{tpu_custom_call.1} parent=1 // pred_check_branch
      %33 = sbr.rel (0) target = $region33
    $region32: #{tpu_custom_call.1} parent=1 // pred_region
      _
    $region33: #{tpu_custom_call.1} parent=1 // pred_fallthru
      _
    // Predicated region
    $region34: #{tpu_custom_call.1} parent=1 // pred_check
      _
    $region35: #{tpu_custom_call.1} parent=1 // pred_check_branch
      %35 = sbr.rel (0) target = $region37
    $region36: #{tpu_custom_call.1} parent=1 // pred_region
      _
    $region37: #{tpu_custom_call.1} parent=1 // pred_fallthru
      _
    // Predicated region
    $region38: #{tpu_custom_call.1} parent=1 // pred_check
      _
    $region39: #{tpu_custom_call.1} parent=1 // pred_check_branch
      %37 = sbr.rel (0) target = $region41
    $region40: #{tpu_custom_call.1} parent=1 // pred_region
      _
    $region41: #{tpu_custom_call.1} parent=1 // pred_fallthru
      _
    // Predicated region
    $region42: #{tpu_custom_call.1} parent=1 // pred_check
      _
    $region43: #{tpu_custom_call.1} parent=1 // pred_check_branch
      %39 = sbr.rel (0) target = $region45
    $region44: #{tpu_custom_call.1} parent=1 // pred_region
      _
    $region45: #{tpu_custom_call.1} parent=1 // pred_fallthru
      _
    // Predicated region
    $region46: #{tpu_custom_call.1} parent=1 // pred_check
      _
    $region47: #{tpu_custom_call.1} parent=1 // pred_check_branch
      %41 = sbr.rel (0) target = $region49
    $region48: #{tpu_custom_call.1} parent=1 // pred_region
      _
    $region49: #{tpu_custom_call.1} parent=1 // pred_fallthru
      _
    %v43 = vld [vmem:[%s0] sm:$0x3]
    %v44 = vlaneseq
    %v45 = vand.u32 %v44, 127
    %v46 = vlaneseq
    %v47 = vshrl.u32 %v46, 7
    %v48 = vsub.s32 0, %v47
    %v49 = vrot.slane %v43, %v48
    %51 = vbcast.lane.b32.xlu0 %v49, 256
    %v52 = vpop.permute.xlu0 %51
    %v53 = vlaneseq
    %v54 = vshrl.u32 %v53, 7
    %v55 = vsub.s32 1, %v54
    %v56 = vrot.slane %v43, %v55
    %58 = vbcast.lane.b32.xlu0 %v56, 256
    %v59 = vpop.permute.xlu0 %58
    %vm60 = vcmp.eq.s32.totalorder %v52, %v45
    %vm61 = vcmp.eq.s32.totalorder %v59, %v45
    %v62 = vsel %vm60, 1, 0
    %v63 = vsel %vm61, 1, 0
    %v64 = vcvt.s32.f32 %v62
    %v65 = vcvt.s32.f32 %v63
    %v66 = vld [vmem:[%s3] sm:$0xff]
    %v67 = vld [vmem:[%s3 + $0x8] sm:$0xff]
    %v68 = vld [vmem:[%s3 + $0x10] sm:$0xff]
    %v69 = vld [vmem:[%s3 + $0x18] sm:$0xff]
    %v70 = vld [vmem:[%s3 + $0x20] sm:$0xff]
    %v71 = vld [vmem:[%s3 + $0x28] sm:$0xff]
    %v72 = vld [vmem:[%s3 + $0x30] sm:$0xff]
    %v73 = vld [vmem:[%s3 + $0x38] sm:$0xff]
    %vm74 = vcmask 523264
    %v76 = vsel %vm74, %v64, 0
    %v79 = vsel %vm74, %v65, 0
    %81 = vmatprep.subr.mxu0 0.0
    %82 = vmatpush1.msra.mxu0 %v66
    %83 = vmatprep.subr.mxu0 0.0
    %84 = vmatpush1.msra.mxu0 %v67
    %85 = vmatprep.subr.mxu0 0.0
    %86 = vmatpush1.msra.mxu0 %v68
    %87 = vmatprep.subr.mxu0 0.0
    %88 = vmatpush1.msra.mxu0 %v69
    %89 = vmatprep.subr.mxu0 0.0
    %90 = vmatpush1.msra.mxu0 %v70
    %91 = vmatprep.subr.mxu0 0.0
    %92 = vmatpush1.msra.mxu0 %v71
    %93 = vmatprep.subr.mxu0 0.0
    %94 = vmatpush1.msra.mxu0 %v72
    %95 = vmatprep.subr.mxu0 0.0
    %96 = vmatpush1.msra.mxu0 %v73
    %97 = vmatprep.subr.mxu0 0.0
    %98 = vmatpush1.msra.mxu0 0.0
    %99 = vmatprep.subr.mxu0 0.0
    %100 = vmatpush1.msra.mxu0 0.0
    %101 = vmatprep.subr.mxu0 0.0
    %102 = vmatpush1.msra.mxu0 0.0
    %103 = vmatprep.subr.mxu0 0.0
    %104 = vmatpush1.msra.mxu0 0.0
    %105 = vmatprep.subr.mxu0 0.0
    %106 = vmatpush1.msra.mxu0 0.0
    %107 = vmatprep.subr.mxu0 0.0
    %108 = vmatpush1.msra.mxu0 0.0
    %109 = vmatprep.subr.mxu0 0.0
    %110 = vmatpush1.msra.mxu0 0.0
    %111 = vmatprep.subr.mxu0 0.0
    %112 = vmatpush1.msra.mxu0 0.0
    %113 = vmatprep.subr.mxu0 0.0
    %114 = vmatpush1.msra.mxu0 0.0
    %115 = vmatprep.subr.mxu0 0.0
    %116 = vmatpush1.msra.mxu0 0.0
    %117 = vmatprep.subr.mxu0 0.0
    %118 = vmatpush1.msra.mxu0 0.0
    %119 = vmatprep.subr.mxu0 0.0
    %120 = vmatpush1.msra.mxu0 0.0
    %121 = vmatprep.subr.mxu0 0.0
    %122 = vmatpush1.msra.mxu0 0.0
    %123 = vmatprep.subr.mxu0 0.0
    %124 = vmatpush1.msra.mxu0 0.0
    %125 = vmatprep.subr.mxu0 0.0
    %126 = vmatpush1.msra.mxu0 0.0
    %127 = vmatprep.subr.mxu0 0.0
    %128 = vmatpush1.msra.mxu0 0.0
    %129 = vmatprep.subr.mxu0 0.0
    %130 = vmatpush1.msra.mxu0 0.0
    %131 = vmatprep.subr.mxu0 0.0
    %132 = vmatpush1.msra.mxu0 0.0
    %133 = vmatprep.subr.mxu0 0.0
    %134 = vmatpush1.msra.mxu0 0.0
    %135 = vmatprep.subr.mxu0 0.0
    %136 = vmatpush1.msra.mxu0 0.0
    %137 = vmatprep.subr.mxu0 0.0
    %138 = vmatpush1.msra.mxu0 0.0
    %139 = vmatprep.subr.mxu0 0.0
    %140 = vmatpush1.msra.mxu0 0.0
    %141 = vmatprep.subr.mxu0 0.0
    %142 = vmatpush1.msra.mxu0 0.0
    %143 = vmatprep.subr.mxu0 0.0
    %144 = vmatpush1.msra.mxu0 0.0
    %145 = vmatprep.mubr.f32.mxu0 0.0
    %146 = vmatmul.mubr.f32.gmra.mrb[0].mxu0 %v76
    %v147 = vpop.f32.mrb[0].mxu0
    %v148 = vadd.f32 0.0, %v147
    %v149 = vpop.f32.mrb[0].mxu0
    %150 = vmatprep.mubr.f32.mxu0 0.0
    %151 = vmatmul.mubr.f32.gmra.mrb[0].mxu0 %v79
    %v152 = vpop.f32.mrb[0].mxu0
    %v153 = vadd.f32 0.0, %v152
    %v154 = vpop.f32.mrb[0].mxu0
    %155 = vdwg.mxu0
    %v156 = vld [vmem:[%s2] sm:$0xff]
    %v157 = vadd.f32 %v148, %v156
    %v158 = vadd.f32 %v153, %v156
    %v159 = vld [vmem:[%s4] sm:$0x3]
    %vm160 = vcmask 261120
    %v161 = vsel %vm160, %v157, 0.0
    %162 = vadd.xlane.f32.xlu0 %v161
    %v163 = vpop.xlane.xlu0 %162
    %v164 = vsel %vm160, %v158, 0.0
    %165 = vadd.xlane.f32.xlu0 %v164
    %v166 = vpop.xlane.xlu0 %165
    %v167 = vrcp.pop 32.0
    %v168 = vmul.f32 %v163, %v167
    %v169 = vmul.f32 %v166, %v167
    %v170 = vsub.f32 %v157, %v168
    %v171 = vsub.f32 %v158, %v169
    %v172 = vmul.f32 %v170, %v170
    %v173 = vmul.f32 %v171, %v171
    %v174 = vsel %vm160, %v172, 0.0
    %175 = vadd.xlane.f32.xlu0 %v174
    %v176 = vpop.xlane.xlu0 %175
    %v177 = vsel %vm160, %v173, 0.0
    %178 = vadd.xlane.f32.xlu0 %v177
    %v179 = vpop.xlane.xlu0 %178
    %v180 = vmul.f32 %v176, %v167
    %v181 = vmul.f32 %v179, %v167
    %v182 = vadd.f32 %v180, 1e-12
    %v183 = vadd.f32 %v181, 1e-12
    %v184 = vrsqrt.pop %v182
    %v185 = vrsqrt.pop %v183
    %v186 = vmul.f32 %v170, %v184
    %v187 = vmul.f32 %v171, %v185
    %v188 = vlaneseq
    %v189 = vshrl.u32 %v188, 7
    %v190 = vsub.s32 0, %v189
    %v191 = vrot.slane %v159, %v190
    %v192 = vmul.f32 %v186, %v191
    %v193 = vmul.f32 %v187, %v191
    %v194 = vlaneseq
    %v195 = vshrl.u32 %v194, 7
    %v196 = vsub.s32 1, %v195
    %v197 = vrot.slane %v159, %v196
    %v198 = vadd.f32 %v192, %v197
    %v199 = vadd.f32 %v193, %v197
    %v200 = vld [vmem:[%s1] sm:$0x1]
    %v201 = vld [vmem:[%s1 + $0x1] sm:$0x1]
    %v202 = vld [vmem:[%s5] sm:$0xf]
    %v203 = vld [vmem:[%s5 + $0x4] sm:$0xf]
    %v204 = vld [vmem:[%s5 + $0x8] sm:$0xf]
    %v205 = vld [vmem:[%s5 + $0xc] sm:$0xf]
    %v206 = vld [vmem:[%s6] sm:$0x1]
    %v207 = vld [vmem:[%s7] sm:$0xf]
    %v208 = vld [vmem:[%s7 + $0x4] sm:$0xf]
    %v209 = vld [vmem:[%s7 + $0x8] sm:$0xf]
    %v210 = vld [vmem:[%s7 + $0xc] sm:$0xf]
    %v211 = vld [vmem:[%s8] sm:$0xf]
    %v212 = vld [vmem:[%s8 + $0x4] sm:$0xf]
    %v213 = vld [vmem:[%s8 + $0x8] sm:$0xf]
    %v214 = vld [vmem:[%s8 + $0xc] sm:$0xf]
    %v215 = vld [vmem:[%s9] sm:$0x1]
    %v216 = vld [vmem:[%s10] sm:$0xf]
    %v217 = vld [vmem:[%s10 + $0x4] sm:$0xf]
    %v218 = vld [vmem:[%s10 + $0x8] sm:$0xf]
    %v219 = vld [vmem:[%s10 + $0xc] sm:$0xf]
    %v220 = vld [vmem:[%s10 + $0x10] sm:$0xf]
    %v221 = vld [vmem:[%s10 + $0x14] sm:$0xf]
    %v222 = vld [vmem:[%s10 + $0x18] sm:$0xf]
    %v223 = vld [vmem:[%s10 + $0x1c] sm:$0xf]
    %v224 = vld [vmem:[%s11] sm:$0x3f]
    %v225 = vpack.c.bf16 %v199, %v198
    %v227 = vlaneseq
    %v228 = vshrl.u32 %v227, 7
    %v229 = vsub.s32 0, %v228
    %v230 = vrot.slane %v206, %v229
    %v236 = vunpack.c.l.b16 %v202
    %v237 = vunpack.c.l.b16 %v203
    %v238 = vunpack.c.l.b16 %v204
    %v239 = vunpack.c.l.b16 %v205
    %v240 = vpack.c.b16 %v237, %v236
    %v241 = vpack.c.b16 %v239, %v238
    %v245 = vsel %vm160, %v225, 0
    %247 = vmatprep.subr.bf16.mxu0 0
    %248 = vmatpush1.bf16.msra.mxu0 %v240
    %249 = vmatprep.subr.bf16.mxu0 0
    %250 = vmatpush1.bf16.msra.mxu0 %v241
    %251 = vmatprep.subr.bf16.mxu0 0
    %252 = vmatpush1.bf16.msra.mxu0 0
    %253 = vmatprep.subr.bf16.mxu0 0
    %254 = vmatpush1.bf16.msra.mxu0 0
    %255 = vmatprep.subr.bf16.mxu0 0
    %256 = vmatpush1.bf16.msra.mxu0 0
    %257 = vmatprep.subr.bf16.mxu0 0
    %258 = vmatpush1.bf16.msra.mxu0 0
    %259 = vmatprep.subr.bf16.mxu0 0
    %260 = vmatpush1.bf16.msra.mxu0 0
    %261 = vmatprep.subr.bf16.mxu0 0
    %262 = vmatpush1.bf16.msra.mxu0 0
    %263 = vmatprep.subr.bf16.mxu0 0
    %264 = vmatpush1.bf16.msra.mxu0 0
    %265 = vmatprep.subr.bf16.mxu0 0
    %266 = vmatpush1.bf16.msra.mxu0 0
    %267 = vmatprep.subr.bf16.mxu0 0
    %268 = vmatpush1.bf16.msra.mxu0 0
    %269 = vmatprep.subr.bf16.mxu0 0
    %270 = vmatpush1.bf16.msra.mxu0 0
    %271 = vmatprep.subr.bf16.mxu0 0
    %272 = vmatpush1.bf16.msra.mxu0 0
    %273 = vmatprep.subr.bf16.mxu0 0
    %274 = vmatpush1.bf16.msra.mxu0 0
    %275 = vmatprep.subr.bf16.mxu0 0
    %276 = vmatpush1.bf16.msra.mxu0 0
    %277 = vmatprep.subr.bf16.mxu0 0
    %278 = vmatpush1.bf16.msra.mxu0 0
    %279 = vmatprep.mubr.bf16.mxu0 0
    %280 = vmatmul.mubr.bf16.gmra.mrb[0].mxu0 %v245
    %v281 = vpop.f32.mrb[0].mxu0
    %v282 = vadd.f32 %v230, %v281
    %v283 = vpop.f32.mrb[0].mxu0
    %v284 = vpop.f32.mrb[0].mxu0
    %v285 = vadd.f32 %v230, %v284
    %v286 = vpop.f32.mrb[0].mxu0
    %287 = vdwg.mxu0
    %v288 = vpack.c.bf16 %v282, %v282
    %v289 = vpack.c.bf16 %v285, %v285
    %291 = vrot.lane.b32.xlu0 %v288, 96
    %v292 = vpop.permute.xlu0 %291
    %vm293 = vcmask 130048
    %v295 = vsel %vm293, %v288, 0
    %v298 = vsel %vm293, %v292, 0
    %300 = vmatprep.subr.bf16.mxu0 0
    %301 = vmatpush1.bf16.xpose.msra.mxu0 %v298
    %302 = vmatprep.subr.bf16.mxu0 0
    %303 = vmatpush1.bf16.xpose.msra.mxu0 0
    %304 = vmatprep.subr.bf16.mxu0 0
    %305 = vmatpush1.bf16.xpose.msra.mxu0 0
    %306 = vmatprep.subr.bf16.mxu0 0
    %307 = vmatpush1.bf16.xpose.msra.mxu0 0
    %308 = vmatprep.subr.bf16.mxu0 0
    %309 = vmatpush1.bf16.xpose.msra.mxu0 0
    %310 = vmatprep.subr.bf16.mxu0 0
    %311 = vmatpush1.bf16.xpose.msra.mxu0 0
    %312 = vmatprep.subr.bf16.mxu0 0
    %313 = vmatpush1.bf16.xpose.msra.mxu0 0
    %314 = vmatprep.subr.bf16.mxu0 0
    %315 = vmatpush1.bf16.xpose.msra.mxu0 0
    %316 = vmatprep.subr.bf16.mxu0 0
    %317 = vmatpush1.bf16.xpose.msra.mxu0 0
    %318 = vmatprep.subr.bf16.mxu0 0
    %319 = vmatpush1.bf16.xpose.msra.mxu0 0
    %320 = vmatprep.subr.bf16.mxu0 0
    %321 = vmatpush1.bf16.xpose.msra.mxu0 0
    %322 = vmatprep.subr.bf16.mxu0 0
    %323 = vmatpush1.bf16.xpose.msra.mxu0 0
    %324 = vmatprep.subr.bf16.mxu0 0
    %325 = vmatpush1.bf16.xpose.msra.mxu0 0
    %326 = vmatprep.subr.bf16.mxu0 0
    %327 = vmatpush1.bf16.xpose.msra.mxu0 0
    %328 = vmatprep.subr.bf16.mxu0 0
    %329 = vmatpush1.bf16.xpose.msra.mxu0 0
    %330 = vmatprep.subr.bf16.mxu0 0
    %331 = vmatpush1.bf16.xpose.msra.mxu0 0
    %332 = vmatprep.mubr.bf16.mxu0 0
    %333 = vmatmul.mubr.bf16.gmra.mrb[0].mxu0 %v295
    %v334 = vpop.f32.mrb[0].mxu0
    %v335 = vadd.f32 0.0, %v334
    %v336 = vpop.f32.mrb[0].mxu0
    %v337 = vpop.f32.mrb[0].mxu0
    %v338 = vpop.f32.mrb[0].mxu0
    %339 = vdwg.mxu0
    %341 = vrot.lane.b32.xlu0 %v289, 96
    %v342 = vpop.permute.xlu0 %341
    %v344 = vsel %vm293, %v289, 0
    %v347 = vsel %vm293, %v342, 0
    %349 = vmatprep.subr.bf16.mxu0 0
    %350 = vmatpush1.bf16.xpose.msra.mxu0 %v347
    %351 = vmatprep.subr.bf16.mxu0 0
    %352 = vmatpush1.bf16.xpose.msra.mxu0 0
    %353 = vmatprep.subr.bf16.mxu0 0
    %354 = vmatpush1.bf16.xpose.msra.mxu0 0
    %355 = vmatprep.subr.bf16.mxu0 0
    %356 = vmatpush1.bf16.xpose.msra.mxu0 0
    %357 = vmatprep.subr.bf16.mxu0 0
    %358 = vmatpush1.bf16.xpose.msra.mxu0 0
    %359 = vmatprep.subr.bf16.mxu0 0
    %360 = vmatpush1.bf16.xpose.msra.mxu0 0
    %361 = vmatprep.subr.bf16.mxu0 0
    %362 = vmatpush1.bf16.xpose.msra.mxu0 0
    %363 = vmatprep.subr.bf16.mxu0 0
    %364 = vmatpush1.bf16.xpose.msra.mxu0 0
    %365 = vmatprep.subr.bf16.mxu0 0
    %366 = vmatpush1.bf16.xpose.msra.mxu0 0
    %367 = vmatprep.subr.bf16.mxu0 0
    %368 = vmatpush1.bf16.xpose.msra.mxu0 0
    %369 = vmatprep.subr.bf16.mxu0 0
    %370 = vmatpush1.bf16.xpose.msra.mxu0 0
    %371 = vmatprep.subr.bf16.mxu0 0
    %372 = vmatpush1.bf16.xpose.msra.mxu0 0
    %373 = vmatprep.subr.bf16.mxu0 0
    %374 = vmatpush1.bf16.xpose.msra.mxu0 0
    %375 = vmatprep.subr.bf16.mxu0 0
    %376 = vmatpush1.bf16.xpose.msra.mxu0 0
    %377 = vmatprep.subr.bf16.mxu0 0
    %378 = vmatpush1.bf16.xpose.msra.mxu0 0
    %379 = vmatprep.subr.bf16.mxu0 0
    %380 = vmatpush1.bf16.xpose.msra.mxu0 0
    %381 = vmatprep.mubr.bf16.mxu0 0
    %382 = vmatmul.mubr.bf16.gmra.mrb[0].mxu0 %v344
    %v383 = vpop.f32.mrb[0].mxu0
    %v384 = vadd.f32 0.0, %v383
    %v385 = vpop.f32.mrb[0].mxu0
    %v386 = vpop.f32.mrb[0].mxu0
    %v387 = vpop.f32.mrb[0].mxu0
    %388 = vdwg.mxu0
    %v389 = vmul.f32 %v335, 0.25
    %v390 = vmul.f32 %v384, 0.25
    %v393 = vlaneseq
    %v394 = vshrl.u32 %v393, 7
    %v395 = vsub.s32 0, %v394
    %v396 = vrot.slane %v200, %v395
    %v397 = vlaneseq
    %v398 = vshrl.u32 %v397, 7
    %v399 = vsub.s32 0, %v398
    %v400 = vrot.slane %v201, %v399
    %v403 = vadd.f32 %v389, %v396
    %v404 = vadd.f32 %v390, %v400
    %vm405 = vcmask 64512
    %v406 = vsel %vm405, %v403, -inf
    %407 = vmax.xlane.f32.xlu0 %v406
    %v408 = vpop.xlane.xlu0 %407
    %v409 = vsel %vm405, %v404, -inf
    %410 = vmax.xlane.f32.xlu0 %v409
    %v411 = vpop.xlane.xlu0 %410
    %v412 = vsub.f32 %v403, %v408
    %v413 = vsub.f32 %v404, %v411
    %v414 = vmul.f32 %v412, 1.442695
    %v415 = vpow.pop %v414
    %v416 = vmul.f32 %v413, 1.442695
    %v417 = vpow.pop %v416
    %v418 = vsel %vm405, %v415, 0.0
    %419 = vadd.xlane.f32.xlu0 %v418
    %v420 = vpop.xlane.xlu0 %419
    %v421 = vsel %vm405, %v417, 0.0
    %422 = vadd.xlane.f32.xlu0 %v421
    %v423 = vpop.xlane.xlu0 %422
    %v424 = vrcp.pop %v420
    %v425 = vrcp.pop %v423
    %v426 = vmul.f32 %v415, %v424
    %v427 = vmul.f32 %v417, %v425
    %v428 = vpack.c.bf16 %v426, %v426
    %v429 = vpack.c.bf16 %v427, %v427
    %430 = vrot.lane.b32.xlu0 %v288, 64
    %v431 = vpop.permute.xlu0 %430
    %v433 = vsel %vm405, %v428, 0
    %vm435 = vcmask 1043456
    %v437 = vsel %vm435, %v431, 0
    %439 = vmatprep.subr.bf16.mxu0 0
    %440 = vmatpush1.bf16.msra.mxu0 %v437
    %441 = vmatprep.subr.bf16.mxu0 0
    %442 = vmatpush1.bf16.msra.mxu0 0
    %443 = vmatprep.subr.bf16.mxu0 0
    %444 = vmatpush1.bf16.msra.mxu0 0
    %445 = vmatprep.subr.bf16.mxu0 0
    %446 = vmatpush1.bf16.msra.mxu0 0
    %447 = vmatprep.subr.bf16.mxu0 0
    %448 = vmatpush1.bf16.msra.mxu0 0
    %449 = vmatprep.subr.bf16.mxu0 0
    %450 = vmatpush1.bf16.msra.mxu0 0
    %451 = vmatprep.subr.bf16.mxu0 0
    %452 = vmatpush1.bf16.msra.mxu0 0
    %453 = vmatprep.subr.bf16.mxu0 0
    %454 = vmatpush1.bf16.msra.mxu0 0
    %455 = vmatprep.subr.bf16.mxu0 0
    %456 = vmatpush1.bf16.msra.mxu0 0
    %457 = vmatprep.subr.bf16.mxu0 0
    %458 = vmatpush1.bf16.msra.mxu0 0
    %459 = vmatprep.subr.bf16.mxu0 0
    %460 = vmatpush1.bf16.msra.mxu0 0
    %461 = vmatprep.subr.bf16.mxu0 0
    %462 = vmatpush1.bf16.msra.mxu0 0
    %463 = vmatprep.subr.bf16.mxu0 0
    %464 = vmatpush1.bf16.msra.mxu0 0
    %465 = vmatprep.subr.bf16.mxu0 0
    %466 = vmatpush1.bf16.msra.mxu0 0
    %467 = vmatprep.subr.bf16.mxu0 0
    %468 = vmatpush1.bf16.msra.mxu0 0
    %469 = vmatprep.subr.bf16.mxu0 0
    %470 = vmatpush1.bf16.msra.mxu0 0
    %471 = vmatprep.mubr.bf16.mxu0 0
    %472 = vmatmul.mubr.bf16.gmra.mrb[0].mxu0 %v433
    %v473 = vpop.f32.mrb[0].mxu0
    %v474 = vadd.f32 0.0, %v473
    %v475 = vpop.f32.mrb[0].mxu0
    %v476 = vpop.f32.mrb[0].mxu0
    %v477 = vpop.f32.mrb[0].mxu0
    %478 = vdwg.mxu0
    %479 = vrot.lane.b32.xlu0 %v289, 64
    %v480 = vpop.permute.xlu0 %479
    %v482 = vsel %vm405, %v429, 0
    %v485 = vsel %vm435, %v480, 0
    %487 = vmatprep.subr.bf16.mxu0 0
    %488 = vmatpush1.bf16.msra.mxu0 %v485
    %489 = vmatprep.subr.bf16.mxu0 0
    %490 = vmatpush1.bf16.msra.mxu0 0
    %491 = vmatprep.subr.bf16.mxu0 0
    %492 = vmatpush1.bf16.msra.mxu0 0
    %493 = vmatprep.subr.bf16.mxu0 0
    %494 = vmatpush1.bf16.msra.mxu0 0
    %495 = vmatprep.subr.bf16.mxu0 0
    %496 = vmatpush1.bf16.msra.mxu0 0
    %497 = vmatprep.subr.bf16.mxu0 0
    %498 = vmatpush1.bf16.msra.mxu0 0
    %499 = vmatprep.subr.bf16.mxu0 0
    %500 = vmatpush1.bf16.msra.mxu0 0
    %501 = vmatprep.subr.bf16.mxu0 0
    %502 = vmatpush1.bf16.msra.mxu0 0
    %503 = vmatprep.subr.bf16.mxu0 0
    %504 = vmatpush1.bf16.msra.mxu0 0
    %505 = vmatprep.subr.bf16.mxu0 0
    %506 = vmatpush1.bf16.msra.mxu0 0
    %507 = vmatprep.subr.bf16.mxu0 0
    %508 = vmatpush1.bf16.msra.mxu0 0
    %509 = vmatprep.subr.bf16.mxu0 0
    %510 = vmatpush1.bf16.msra.mxu0 0
    %511 = vmatprep.subr.bf16.mxu0 0
    %512 = vmatpush1.bf16.msra.mxu0 0
    %513 = vmatprep.subr.bf16.mxu0 0
    %514 = vmatpush1.bf16.msra.mxu0 0
    %515 = vmatprep.subr.bf16.mxu0 0
    %516 = vmatpush1.bf16.msra.mxu0 0
    %517 = vmatprep.subr.bf16.mxu0 0
    %518 = vmatpush1.bf16.msra.mxu0 0
    %519 = vmatprep.mubr.bf16.mxu0 0
    %520 = vmatmul.mubr.bf16.gmra.mrb[0].mxu0 %v482
    %v521 = vpop.f32.mrb[0].mxu0
    %v522 = vadd.f32 0.0, %v521
    %v523 = vpop.f32.mrb[0].mxu0
    %v524 = vpop.f32.mrb[0].mxu0
    %v525 = vpop.f32.mrb[0].mxu0
    %526 = vdwg.mxu0
    %527 = vrot.lane.b32.xlu0 %v288, 112
    %v528 = vpop.permute.xlu0 %527
    %529 = vrot.lane.b32.xlu0 %v288, 80
    %v530 = vpop.permute.xlu0 %529
    %v532 = vsel %vm293, %v528, 0
    %v535 = vsel %vm293, %v530, 0
    %537 = vmatprep.subr.bf16.mxu0 0
    %538 = vmatpush1.bf16.xpose.msra.mxu0 %v535
    %539 = vmatprep.subr.bf16.mxu0 0
    %540 = vmatpush1.bf16.xpose.msra.mxu0 0
    %541 = vmatprep.subr.bf16.mxu0 0
    %542 = vmatpush1.bf16.xpose.msra.mxu0 0
    %543 = vmatprep.subr.bf16.mxu0 0
    %544 = vmatpush1.bf16.xpose.msra.mxu0 0
    %545 = vmatprep.subr.bf16.mxu0 0
    %546 = vmatpush1.bf16.xpose.msra.mxu0 0
    %547 = vmatprep.subr.bf16.mxu0 0
    %548 = vmatpush1.bf16.xpose.msra.mxu0 0
    %549 = vmatprep.subr.bf16.mxu0 0
    %550 = vmatpush1.bf16.xpose.msra.mxu0 0
    %551 = vmatprep.subr.bf16.mxu0 0
    %552 = vmatpush1.bf16.xpose.msra.mxu0 0
    %553 = vmatprep.subr.bf16.mxu0 0
    %554 = vmatpush1.bf16.xpose.msra.mxu0 0
    %555 = vmatprep.subr.bf16.mxu0 0
    %556 = vmatpush1.bf16.xpose.msra.mxu0 0
    %557 = vmatprep.subr.bf16.mxu0 0
    %558 = vmatpush1.bf16.xpose.msra.mxu0 0
    %559 = vmatprep.subr.bf16.mxu0 0
    %560 = vmatpush1.bf16.xpose.msra.mxu0 0
    %561 = vmatprep.subr.bf16.mxu0 0
    %562 = vmatpush1.bf16.xpose.msra.mxu0 0
    %563 = vmatprep.subr.bf16.mxu0 0
    %564 = vmatpush1.bf16.xpose.msra.mxu0 0
    %565 = vmatprep.subr.bf16.mxu0 0
    %566 = vmatpush1.bf16.xpose.msra.mxu0 0
    %567 = vmatprep.subr.bf16.mxu0 0
    %568 = vmatpush1.bf16.xpose.msra.mxu0 0
    %569 = vmatprep.mubr.bf16.mxu0 0
    %570 = vmatmul.mubr.bf16.gmra.mrb[0].mxu0 %v532
    %v571 = vpop.f32.mrb[0].mxu0
    %v572 = vadd.f32 0.0, %v571
    %v573 = vpop.f32.mrb[0].mxu0
    %v574 = vpop.f32.mrb[0].mxu0
    %v575 = vpop.f32.mrb[0].mxu0
    %576 = vdwg.mxu0
    %577 = vrot.lane.b32.xlu0 %v289, 112
    %v578 = vpop.permute.xlu0 %577
    %579 = vrot.lane.b32.xlu0 %v289, 80
    %v580 = vpop.permute.xlu0 %579
    %v582 = vsel %vm293, %v578, 0
    %v585 = vsel %vm293, %v580, 0
    %587 = vmatprep.subr.bf16.mxu0 0
    %588 = vmatpush1.bf16.xpose.msra.mxu0 %v585
    %589 = vmatprep.subr.bf16.mxu0 0
    %590 = vmatpush1.bf16.xpose.msra.mxu0 0
    %591 = vmatprep.subr.bf16.mxu0 0
    %592 = vmatpush1.bf16.xpose.msra.mxu0 0
    %593 = vmatprep.subr.bf16.mxu0 0
    %594 = vmatpush1.bf16.xpose.msra.mxu0 0
    %595 = vmatprep.subr.bf16.mxu0 0
    %596 = vmatpush1.bf16.xpose.msra.mxu0 0
    %597 = vmatprep.subr.bf16.mxu0 0
    %598 = vmatpush1.bf16.xpose.msra.mxu0 0
    %599 = vmatprep.subr.bf16.mxu0 0
    %600 = vmatpush1.bf16.xpose.msra.mxu0 0
    %601 = vmatprep.subr.bf16.mxu0 0
    %602 = vmatpush1.bf16.xpose.msra.mxu0 0
    %603 = vmatprep.subr.bf16.mxu0 0
    %604 = vmatpush1.bf16.xpose.msra.mxu0 0
    %605 = vmatprep.subr.bf16.mxu0 0
    %606 = vmatpush1.bf16.xpose.msra.mxu0 0
    %607 = vmatprep.subr.bf16.mxu0 0
    %608 = vmatpush1.bf16.xpose.msra.mxu0 0
    %609 = vmatprep.subr.bf16.mxu0 0
    %610 = vmatpush1.bf16.xpose.msra.mxu0 0
    %611 = vmatprep.subr.bf16.mxu0 0
    %612 = vmatpush1.bf16.xpose.msra.mxu0 0
    %613 = vmatprep.subr.bf16.mxu0 0
    %614 = vmatpush1.bf16.xpose.msra.mxu0 0
    %615 = vmatprep.subr.bf16.mxu0 0
    %616 = vmatpush1.bf16.xpose.msra.mxu0 0
    %617 = vmatprep.subr.bf16.mxu0 0
    %618 = vmatpush1.bf16.xpose.msra.mxu0 0
    %619 = vmatprep.mubr.bf16.mxu0 0
    %620 = vmatmul.mubr.bf16.gmra.mrb[0].mxu0 %v582
    %v621 = vpop.f32.mrb[0].mxu0
    %v622 = vadd.f32 0.0, %v621
    %v623 = vpop.f32.mrb[0].mxu0
    %v624 = vpop.f32.mrb[0].mxu0
    %v625 = vpop.f32.mrb[0].mxu0
    %626 = vdwg.mxu0
    %v627 = vmul.f32 %v572, 0.25
    %v628 = vmul.f32 %v622, 0.25
    %v629 = vadd.f32 %v627, %v396
    %v630 = vadd.f32 %v628, %v400
    %v631 = vsel %vm405, %v629, -inf
    %632 = vmax.xlane.f32.xlu0 %v631
    %v633 = vpop.xlane.xlu0 %632
    %v634 = vsel %vm405, %v630, -inf
    %635 = vmax.xlane.f32.xlu0 %v634
    %v636 = vpop.xlane.xlu0 %635
    %v637 = vsub.f32 %v629, %v633
    %v638 = vsub.f32 %v630, %v636
    %v639 = vmul.f32 %v637, 1.442695
    %v640 = vpow.pop %v639
    %v641 = vmul.f32 %v638, 1.442695
    %v642 = vpow.pop %v641
    %v643 = vsel %vm405, %v640, 0.0
    %644 = vadd.xlane.f32.xlu0 %v643
    %v645 = vpop.xlane.xlu0 %644
    %v646 = vsel %vm405, %v642, 0.0
    %647 = vadd.xlane.f32.xlu0 %v646
    %v648 = vpop.xlane.xlu0 %647
    %v649 = vrcp.pop %v645
    %v650 = vrcp.pop %v648
    %v651 = vmul.f32 %v640, %v649
    %v652 = vmul.f32 %v642, %v650
    %v653 = vpack.c.bf16 %v651, %v651
    %v654 = vpack.c.bf16 %v652, %v652
    %655 = vrot.lane.b32.xlu0 %v288, 48
    %v656 = vpop.permute.xlu0 %655
    %v658 = vsel %vm405, %v653, 0
    %v661 = vsel %vm435, %v656, 0
    %663 = vmatprep.subr.bf16.mxu0 0
    %664 = vmatpush1.bf16.msra.mxu0 %v661
    %665 = vmatprep.subr.bf16.mxu0 0
    %666 = vmatpush1.bf16.msra.mxu0 0
    %667 = vmatprep.subr.bf16.mxu0 0
    %668 = vmatpush1.bf16.msra.mxu0 0
    %669 = vmatprep.subr.bf16.mxu0 0
    %670 = vmatpush1.bf16.msra.mxu0 0
    %671 = vmatprep.subr.bf16.mxu0 0
    %672 = vmatpush1.bf16.msra.mxu0 0
    %673 = vmatprep.subr.bf16.mxu0 0
    %674 = vmatpush1.bf16.msra.mxu0 0
    %675 = vmatprep.subr.bf16.mxu0 0
    %676 = vmatpush1.bf16.msra.mxu0 0
    %677 = vmatprep.subr.bf16.mxu0 0
    %678 = vmatpush1.bf16.msra.mxu0 0
    %679 = vmatprep.subr.bf16.mxu0 0
    %680 = vmatpush1.bf16.msra.mxu0 0
    %681 = vmatprep.subr.bf16.mxu0 0
    %682 = vmatpush1.bf16.msra.mxu0 0
    %683 = vmatprep.subr.bf16.mxu0 0
    %684 = vmatpush1.bf16.msra.mxu0 0
    %685 = vmatprep.subr.bf16.mxu0 0
    %686 = vmatpush1.bf16.msra.mxu0 0
    %687 = vmatprep.subr.bf16.mxu0 0
    %688 = vmatpush1.bf16.msra.mxu0 0
    %689 = vmatprep.subr.bf16.mxu0 0
    %690 = vmatpush1.bf16.msra.mxu0 0
    %691 = vmatprep.subr.bf16.mxu0 0
    %692 = vmatpush1.bf16.msra.mxu0 0
    %693 = vmatprep.subr.bf16.mxu0 0
    %694 = vmatpush1.bf16.msra.mxu0 0
    %695 = vmatprep.mubr.bf16.mxu0 0
    %696 = vmatmul.mubr.bf16.gmra.mrb[0].mxu0 %v658
    %v697 = vpop.f32.mrb[0].mxu0
    %v698 = vadd.f32 0.0, %v697
    %v699 = vpop.f32.mrb[0].mxu0
    %v700 = vpop.f32.mrb[0].mxu0
    %v701 = vpop.f32.mrb[0].mxu0
    %702 = vdwg.mxu0
    %703 = vrot.lane.b32.xlu0 %v289, 48
    %v704 = vpop.permute.xlu0 %703
    %v706 = vsel %vm405, %v654, 0
    %v709 = vsel %vm435, %v704, 0
    %711 = vmatprep.subr.bf16.mxu0 0
    %712 = vmatpush1.bf16.msra.mxu0 %v709
    %713 = vmatprep.subr.bf16.mxu0 0
    %714 = vmatpush1.bf16.msra.mxu0 0
    %715 = vmatprep.subr.bf16.mxu0 0
    %716 = vmatpush1.bf16.msra.mxu0 0
    %717 = vmatprep.subr.bf16.mxu0 0
    %718 = vmatpush1.bf16.msra.mxu0 0
    %719 = vmatprep.subr.bf16.mxu0 0
    %720 = vmatpush1.bf16.msra.mxu0 0
    %721 = vmatprep.subr.bf16.mxu0 0
    %722 = vmatpush1.bf16.msra.mxu0 0
    %723 = vmatprep.subr.bf16.mxu0 0
    %724 = vmatpush1.bf16.msra.mxu0 0
    %725 = vmatprep.subr.bf16.mxu0 0
    %726 = vmatpush1.bf16.msra.mxu0 0
    %727 = vmatprep.subr.bf16.mxu0 0
    %728 = vmatpush1.bf16.msra.mxu0 0
    %729 = vmatprep.subr.bf16.mxu0 0
    %730 = vmatpush1.bf16.msra.mxu0 0
    %731 = vmatprep.subr.bf16.mxu0 0
    %732 = vmatpush1.bf16.msra.mxu0 0
    %733 = vmatprep.subr.bf16.mxu0 0
    %734 = vmatpush1.bf16.msra.mxu0 0
    %735 = vmatprep.subr.bf16.mxu0 0
    %736 = vmatpush1.bf16.msra.mxu0 0
    %737 = vmatprep.subr.bf16.mxu0 0
    %738 = vmatpush1.bf16.msra.mxu0 0
    %739 = vmatprep.subr.bf16.mxu0 0
    %740 = vmatpush1.bf16.msra.mxu0 0
    %741 = vmatprep.subr.bf16.mxu0 0
    %742 = vmatpush1.bf16.msra.mxu0 0
    %743 = vmatprep.mubr.bf16.mxu0 0
    %744 = vmatmul.mubr.bf16.gmra.mrb[0].mxu0 %v706
    %v745 = vpop.f32.mrb[0].mxu0
    %v746 = vadd.f32 0.0, %v745
    %v747 = vpop.f32.mrb[0].mxu0
    %v748 = vpop.f32.mrb[0].mxu0
    %v749 = vpop.f32.mrb[0].mxu0
    %750 = vdwg.mxu0
    %753 = vrot.lane.b32.xlu0 %v698, 16
    %v754 = vpop.permute.xlu0 %753
    %755 = vrot.lane.b32.xlu0 %v746, 16
    %v756 = vpop.permute.xlu0 %755
    %v759 = vsel %vm293, %v474, %v754
    %v760 = vsel %vm293, %v522, %v756
    %v761 = vpack.c.bf16 %v760, %v759
    %v762 = vlaneseq
    %v763 = vshrl.u32 %v762, 7
    %v764 = vsub.s32 0, %v763
    %v765 = vrot.slane %v224, %v764
    %v770 = vunpack.c.l.b16 %v207
    %v771 = vunpack.c.l.b16 %v208
    %v772 = vunpack.c.l.b16 %v209
    %v773 = vunpack.c.l.b16 %v210
    %v774 = vpack.c.b16 %v771, %v770
    %v775 = vpack.c.b16 %v773, %v772
    %v779 = vsel %vm160, %v761, 0
    %781 = vmatprep.subr.bf16.mxu0 0
    %782 = vmatpush1.bf16.msra.mxu0 %v774
    %783 = vmatprep.subr.bf16.mxu0 0
    %784 = vmatpush1.bf16.msra.mxu0 %v775
    %785 = vmatprep.subr.bf16.mxu0 0
    %786 = vmatpush1.bf16.msra.mxu0 0
    %787 = vmatprep.subr.bf16.mxu0 0
    %788 = vmatpush1.bf16.msra.mxu0 0
    %789 = vmatprep.subr.bf16.mxu0 0
    %790 = vmatpush1.bf16.msra.mxu0 0
    %791 = vmatprep.subr.bf16.mxu0 0
    %792 = vmatpush1.bf16.msra.mxu0 0
    %793 = vmatprep.subr.bf16.mxu0 0
    %794 = vmatpush1.bf16.msra.mxu0 0
    %795 = vmatprep.subr.bf16.mxu0 0
    %796 = vmatpush1.bf16.msra.mxu0 0
    %797 = vmatprep.subr.bf16.mxu0 0
    %798 = vmatpush1.bf16.msra.mxu0 0
    %799 = vmatprep.subr.bf16.mxu0 0
    %800 = vmatpush1.bf16.msra.mxu0 0
    %801 = vmatprep.subr.bf16.mxu0 0
    %802 = vmatpush1.bf16.msra.mxu0 0
    %803 = vmatprep.subr.bf16.mxu0 0
    %804 = vmatpush1.bf16.msra.mxu0 0
    %805 = vmatprep.subr.bf16.mxu0 0
    %806 = vmatpush1.bf16.msra.mxu0 0
    %807 = vmatprep.subr.bf16.mxu0 0
    %808 = vmatpush1.bf16.msra.mxu0 0
    %809 = vmatprep.subr.bf16.mxu0 0
    %810 = vmatpush1.bf16.msra.mxu0 0
    %811 = vmatprep.subr.bf16.mxu0 0
    %812 = vmatpush1.bf16.msra.mxu0 0
    %813 = vmatprep.mubr.bf16.mxu0 0
    %814 = vmatmul.mubr.bf16.gmra.mrb[0].mxu0 %v779
    %v815 = vpop.f32.mrb[0].mxu0
    %v816 = vadd.f32 %v765, %v815
    %v817 = vpop.f32.mrb[0].mxu0
    %v818 = vpop.f32.mrb[0].mxu0
    %v819 = vadd.f32 %v765, %v818
    %v820 = vpop.f32.mrb[0].mxu0
    %821 = vdwg.mxu0
    %v822 = vadd.f32 %v198, %v816
    %v823 = vadd.f32 %v199, %v819
    %v824 = vsel %vm160, %v822, 0.0
    %825 = vadd.xlane.f32.xlu0 %v824
    %v826 = vpop.xlane.xlu0 %825
    %v827 = vsel %vm160, %v823, 0.0
    %828 = vadd.xlane.f32.xlu0 %v827
    %v829 = vpop.xlane.xlu0 %828
    %v830 = vmul.f32 %v826, %v167
    %v831 = vmul.f32 %v829, %v167
    %v832 = vsub.f32 %v822, %v830
    %v833 = vsub.f32 %v823, %v831
    %v834 = vmul.f32 %v832, %v832
    %v835 = vmul.f32 %v833, %v833
    %v836 = vsel %vm160, %v834, 0.0
    %837 = vadd.xlane.f32.xlu0 %v836
    %v838 = vpop.xlane.xlu0 %837
    %v839 = vsel %vm160, %v835, 0.0
    %840 = vadd.xlane.f32.xlu0 %v839
    %v841 = vpop.xlane.xlu0 %840
    %v842 = vmul.f32 %v838, %v167
    %v843 = vmul.f32 %v841, %v167
    %v844 = vadd.f32 %v842, 1e-12
    %v845 = vadd.f32 %v843, 1e-12
    %v846 = vrsqrt.pop %v844
    %v847 = vrsqrt.pop %v845
    %v848 = vmul.f32 %v832, %v846
    %v849 = vmul.f32 %v833, %v847
    %v850 = vlaneseq
    %v851 = vshrl.u32 %v850, 7
    %v852 = vsub.s32 1, %v851
    %v853 = vrot.slane %v224, %v852
    %v854 = vmul.f32 %v848, %v853
    %v855 = vmul.f32 %v849, %v853
    %v856 = vlaneseq
    %v857 = vshrl.u32 %v856, 7
    %v858 = vsub.s32 2, %v857
    %v859 = vrot.slane %v224, %v858
    %v860 = vadd.f32 %v854, %v859
    %v861 = vadd.f32 %v855, %v859
    %v862 = vpack.c.bf16 %v861, %v860
    %v864 = vlaneseq
    %v865 = vshrl.u32 %v864, 7
    %v866 = vsub.s32 0, %v865
    %v867 = vrot.slane %v215, %v866
    %v873 = vunpack.c.l.b16 %v211
    %v874 = vunpack.c.l.b16 %v212
    %v875 = vunpack.c.l.b16 %v213
    %v876 = vunpack.c.l.b16 %v214
    %v877 = vpack.c.b16 %v874, %v873
    %v878 = vpack.c.b16 %v876, %v875
    %v882 = vsel %vm160, %v862, 0
    %884 = vmatprep.subr.bf16.mxu0 0
    %885 = vmatpush1.bf16.msra.mxu0 %v877
    %886 = vmatprep.subr.bf16.mxu0 0
    %887 = vmatpush1.bf16.msra.mxu0 %v878
    %888 = vmatprep.subr.bf16.mxu0 0
    %889 = vmatpush1.bf16.msra.mxu0 0
    %890 = vmatprep.subr.bf16.mxu0 0
    %891 = vmatpush1.bf16.msra.mxu0 0
    %892 = vmatprep.subr.bf16.mxu0 0
    %893 = vmatpush1.bf16.msra.mxu0 0
    %894 = vmatprep.subr.bf16.mxu0 0
    %895 = vmatpush1.bf16.msra.mxu0 0
    %896 = vmatprep.subr.bf16.mxu0 0
    %897 = vmatpush1.bf16.msra.mxu0 0
    %898 = vmatprep.subr.bf16.mxu0 0
    %899 = vmatpush1.bf16.msra.mxu0 0
    %900 = vmatprep.subr.bf16.mxu0 0
    %901 = vmatpush1.bf16.msra.mxu0 0
    %902 = vmatprep.subr.bf16.mxu0 0
    %903 = vmatpush1.bf16.msra.mxu0 0
    %904 = vmatprep.subr.bf16.mxu0 0
    %905 = vmatpush1.bf16.msra.mxu0 0
    %906 = vmatprep.subr.bf16.mxu0 0
    %907 = vmatpush1.bf16.msra.mxu0 0
    %908 = vmatprep.subr.bf16.mxu0 0
    %909 = vmatpush1.bf16.msra.mxu0 0
    %910 = vmatprep.subr.bf16.mxu0 0
    %911 = vmatpush1.bf16.msra.mxu0 0
    %912 = vmatprep.subr.bf16.mxu0 0
    %913 = vmatpush1.bf16.msra.mxu0 0
    %914 = vmatprep.subr.bf16.mxu0 0
    %915 = vmatpush1.bf16.msra.mxu0 0
    %916 = vmatprep.mubr.bf16.mxu0 0
    %917 = vmatmul.mubr.bf16.gmra.mrb[0].mxu0 %v882
    %v918 = vpop.f32.mrb[0].mxu0
    %v919 = vadd.f32 %v867, %v918
    %v920 = vpop.f32.mrb[0].mxu0
    %v921 = vpop.f32.mrb[0].mxu0
    %v922 = vadd.f32 %v867, %v921
    %v923 = vpop.f32.mrb[0].mxu0
    %924 = vdwg.mxu0
    %v925 = vmul.f32 %v919, %v919
    %v926 = vmul.f32 %v922, %v922
    %v927 = vmul.f32 %v919, %v925
    %v928 = vmul.f32 %v922, %v926
    %v929 = vmul.f32 %v927, 0.044715
    %v930 = vmul.f32 %v928, 0.044715
    %v931 = vadd.f32 %v919, %v929
    %v932 = vadd.f32 %v922, %v930
    %v933 = vmul.f32 %v931, 0.7978846
    %v934 = vmul.f32 %v932, 0.7978846
    %v935 = vtanh.pop %v933
    %v936 = vtanh.pop %v934
    %v937 = vadd.f32 %v935, 1.0
    %v938 = vadd.f32 %v936, 1.0
    %v939 = vmul.f32 %v937, 0.5
    %v940 = vmul.f32 %v938, 0.5
    %v941 = vmul.f32 %v919, %v939
    %v942 = vmul.f32 %v922, %v940
    %v943 = vpack.c.bf16 %v942, %v941
    %v944 = vlaneseq
    %v945 = vshrl.u32 %v944, 7
    %v946 = vsub.s32 3, %v945
    %v947 = vrot.slane %v224, %v946
    %v956 = vunpack.c.l.b16 %v216
    %v957 = vunpack.c.l.b16 %v217
    %v958 = vunpack.c.l.b16 %v218
    %v959 = vunpack.c.l.b16 %v219
    %v960 = vunpack.c.l.b16 %v220
    %v961 = vunpack.c.l.b16 %v221
    %v962 = vunpack.c.l.b16 %v222
    %v963 = vunpack.c.l.b16 %v223
    %v964 = vpack.c.b16 %v957, %v956
    %v965 = vpack.c.b16 %v959, %v958
    %v966 = vpack.c.b16 %v961, %v960
    %v967 = vpack.c.b16 %v963, %v962
    %v973 = vsel %vm74, %v943, 0
    %975 = vmatprep.subr.bf16.mxu0 0
    %976 = vmatpush1.bf16.msra.mxu0 %v964
    %977 = vmatprep.subr.bf16.mxu0 0
    %978 = vmatpush1.bf16.msra.mxu0 %v965
    %979 = vmatprep.subr.bf16.mxu0 0
    %980 = vmatpush1.bf16.msra.mxu0 %v966
    %981 = vmatprep.subr.bf16.mxu0 0
    %982 = vmatpush1.bf16.msra.mxu0 %v967
    %983 = vmatprep.subr.bf16.mxu0 0
    %984 = vmatpush1.bf16.msra.mxu0 0
    %985 = vmatprep.subr.bf16.mxu0 0
    %986 = vmatpush1.bf16.msra.mxu0 0
    %987 = vmatprep.subr.bf16.mxu0 0
    %988 = vmatpush1.bf16.msra.mxu0 0
    %989 = vmatprep.subr.bf16.mxu0 0
    %990 = vmatpush1.bf16.msra.mxu0 0
    %991 = vmatprep.subr.bf16.mxu0 0
    %992 = vmatpush1.bf16.msra.mxu0 0
    %993 = vmatprep.subr.bf16.mxu0 0
    %994 = vmatpush1.bf16.msra.mxu0 0
    %995 = vmatprep.subr.bf16.mxu0 0
    %996 = vmatpush1.bf16.msra.mxu0 0
    %997 = vmatprep.subr.bf16.mxu0 0
    %998 = vmatpush1.bf16.msra.mxu0 0
    %999 = vmatprep.subr.bf16.mxu0 0
    %1000 = vmatpush1.bf16.msra.mxu0 0
    %1001 = vmatprep.subr.bf16.mxu0 0
    %1002 = vmatpush1.bf16.msra.mxu0 0
    %1003 = vmatprep.subr.bf16.mxu0 0
    %1004 = vmatpush1.bf16.msra.mxu0 0
    %1005 = vmatprep.subr.bf16.mxu0 0
    %1006 = vmatpush1.bf16.msra.mxu0 0
    %1007 = vmatprep.mubr.bf16.mxu0 0
    %1008 = vmatmul.mubr.bf16.gmra.mrb[0].mxu0 %v973
    %v1009 = vpop.f32.mrb[0].mxu0
    %v1010 = vadd.f32 %v947, %v1009
    %v1011 = vpop.f32.mrb[0].mxu0
    %v1012 = vpop.f32.mrb[0].mxu0
    %v1013 = vadd.f32 %v947, %v1012
    %v1014 = vpop.f32.mrb[0].mxu0
    %1015 = vdwg.mxu0
    %v1016 = vadd.f32 %v860, %v1010
    %v1017 = vadd.f32 %v861, %v1013
    %v1018 = vsel %vm160, %v1016, 0.0
    %1019 = vadd.xlane.f32.xlu0 %v1018
    %v1020 = vpop.xlane.xlu0 %1019
    %v1021 = vsel %vm160, %v1017, 0.0
    %1022 = vadd.xlane.f32.xlu0 %v1021
    %v1023 = vpop.xlane.xlu0 %1022
    %v1024 = vmul.f32 %v1020, %v167
    %v1025 = vmul.f32 %v1023, %v167
    %v1026 = vsub.f32 %v1016, %v1024
    %v1027 = vsub.f32 %v1017, %v1025
    %v1028 = vmul.f32 %v1026, %v1026
    %v1029 = vmul.f32 %v1027, %v1027
    %v1030 = vsel %vm160, %v1028, 0.0
    %1031 = vadd.xlane.f32.xlu0 %v1030
    %v1032 = vpop.xlane.xlu0 %1031
    %v1033 = vsel %vm160, %v1029, 0.0
    %1034 = vadd.xlane.f32.xlu0 %v1033
    %v1035 = vpop.xlane.xlu0 %1034
    %v1036 = vmul.f32 %v1032, %v167
    %v1037 = vmul.f32 %v1035, %v167
    %v1038 = vadd.f32 %v1036, 1e-12
    %v1039 = vadd.f32 %v1037, 1e-12
    %v1040 = vrsqrt.pop %v1038
    %v1041 = vrsqrt.pop %v1039
    %v1042 = vmul.f32 %v1026, %v1040
    %v1043 = vmul.f32 %v1027, %v1041
    %v1044 = vlaneseq
    %v1045 = vshrl.u32 %v1044, 7
    %v1046 = vsub.s32 4, %v1045
    %v1047 = vrot.slane %v224, %v1046
    %v1048 = vmul.f32 %v1042, %v1047
    %v1049 = vmul.f32 %v1043, %v1047
    %v1050 = vlaneseq
    %v1051 = vshrl.u32 %v1050, 7
    %v1052 = vsub.s32 5, %v1051
    %v1053 = vrot.slane %v224, %v1052
    %v1054 = vadd.f32 %v1048, %v1053
    %v1055 = vadd.f32 %v1049, %v1053
    %s1056 = scalar_lea.vmem %s5, 16
    %v1057 = vld [vmem:[%s1056] sm:$0xf]
    %v1058 = vld [vmem:[%s1056 + $0x4] sm:$0xf]
    %v1059 = vld [vmem:[%s1056 + $0x8] sm:$0xf]
    %v1060 = vld [vmem:[%s1056 + $0xc] sm:$0xf]
    %s1061 = scalar_lea.vmem %s6, 1
    %v1062 = vld [vmem:[%s1061] sm:$0x1]
    %s1063 = scalar_lea.vmem %s7, 16
    %v1064 = vld [vmem:[%s1063] sm:$0xf]
    %v1065 = vld [vmem:[%s1063 + $0x4] sm:$0xf]
    %v1066 = vld [vmem:[%s1063 + $0x8] sm:$0xf]
    %v1067 = vld [vmem:[%s1063 + $0xc] sm:$0xf]
    %s1068 = scalar_lea.vmem %s8, 16
    %v1069 = vld [vmem:[%s1068] sm:$0xf]
    %v1070 = vld [vmem:[%s1068 + $0x4] sm:$0xf]
    %v1071 = vld [vmem:[%s1068 + $0x8] sm:$0xf]
    %v1072 = vld [vmem:[%s1068 + $0xc] sm:$0xf]
    %s1073 = scalar_lea.vmem %s9, 1
    %v1074 = vld [vmem:[%s1073] sm:$0x1]
    %s1075 = scalar_lea.vmem %s10, 32
    %v1076 = vld [vmem:[%s1075] sm:$0xf]
    %v1077 = vld [vmem:[%s1075 + $0x4] sm:$0xf]
    %v1078 = vld [vmem:[%s1075 + $0x8] sm:$0xf]
    %v1079 = vld [vmem:[%s1075 + $0xc] sm:$0xf]
    %v1080 = vld [vmem:[%s1075 + $0x10] sm:$0xf]
    %v1081 = vld [vmem:[%s1075 + $0x14] sm:$0xf]
    %v1082 = vld [vmem:[%s1075 + $0x18] sm:$0xf]
    %v1083 = vld [vmem:[%s1075 + $0x1c] sm:$0xf]
    %s1084 = scalar_lea.vmem %s11, 8
    %v1085 = vld [vmem:[%s1084] sm:$0x3f]
    %v1086 = vpack.c.bf16 %v1055, %v1054
    %v1088 = vlaneseq
    %v1089 = vshrl.u32 %v1088, 7
    %v1090 = vsub.s32 0, %v1089
    %v1091 = vrot.slane %v1062, %v1090
    %v1097 = vunpack.c.l.b16 %v1057
    %v1098 = vunpack.c.l.b16 %v1058
    %v1099 = vunpack.c.l.b16 %v1059
    %v1100 = vunpack.c.l.b16 %v1060
    %v1101 = vpack.c.b16 %v1098, %v1097
    %v1102 = vpack.c.b16 %v1100, %v1099
    %v1106 = vsel %vm160, %v1086, 0
    %1108 = vmatprep.subr.bf16.mxu0 0
    %1109 = vmatpush1.bf16.msra.mxu0 %v1101
    %1110 = vmatprep.subr.bf16.mxu0 0
    %1111 = vmatpush1.bf16.msra.mxu0 %v1102
    %1112 = vmatprep.subr.bf16.mxu0 0
    %1113 = vmatpush1.bf16.msra.mxu0 0
    %1114 = vmatprep.subr.bf16.mxu0 0
    %1115 = vmatpush1.bf16.msra.mxu0 0
    %1116 = vmatprep.subr.bf16.mxu0 0
    %1117 = vmatpush1.bf16.msra.mxu0 0
    %1118 = vmatprep.subr.bf16.mxu0 0
    %1119 = vmatpush1.bf16.msra.mxu0 0
    %1120 = vmatprep.subr.bf16.mxu0 0
    %1121 = vmatpush1.bf16.msra.mxu0 0
    %1122 = vmatprep.subr.bf16.mxu0 0
    %1123 = vmatpush1.bf16.msra.mxu0 0
    %1124 = vmatprep.subr.bf16.mxu0 0
    %1125 = vmatpush1.bf16.msra.mxu0 0
    %1126 = vmatprep.subr.bf16.mxu0 0
    %1127 = vmatpush1.bf16.msra.mxu0 0
    %1128 = vmatprep.subr.bf16.mxu0 0
    %1129 = vmatpush1.bf16.msra.mxu0 0
    %1130 = vmatprep.subr.bf16.mxu0 0
    %1131 = vmatpush1.bf16.msra.mxu0 0
    %1132 = vmatprep.subr.bf16.mxu0 0
    %1133 = vmatpush1.bf16.msra.mxu0 0
    %1134 = vmatprep.subr.bf16.mxu0 0
    %1135 = vmatpush1.bf16.msra.mxu0 0
    %1136 = vmatprep.subr.bf16.mxu0 0
    %1137 = vmatpush1.bf16.msra.mxu0 0
    %1138 = vmatprep.subr.bf16.mxu0 0
    %1139 = vmatpush1.bf16.msra.mxu0 0
    %1140 = vmatprep.mubr.bf16.mxu0 0
    %1141 = vmatmul.mubr.bf16.gmra.mrb[0].mxu0 %v1106
    %v1142 = vpop.f32.mrb[0].mxu0
    %v1143 = vadd.f32 %v1091, %v1142
    %v1144 = vpop.f32.mrb[0].mxu0
    %v1145 = vpop.f32.mrb[0].mxu0
    %v1146 = vadd.f32 %v1091, %v1145
    %v1147 = vpop.f32.mrb[0].mxu0
    %1148 = vdwg.mxu0
    %v1149 = vpack.c.bf16 %v1143, %v1143
    %v1150 = vpack.c.bf16 %v1146, %v1146
    %1152 = vrot.lane.b32.xlu0 %v1149, 96
    %v1153 = vpop.permute.xlu0 %1152
    %v1155 = vsel %vm293, %v1149, 0
    %v1158 = vsel %vm293, %v1153, 0
    %1160 = vmatprep.subr.bf16.mxu0 0
    %1161 = vmatpush1.bf16.xpose.msra.mxu0 %v1158
    %1162 = vmatprep.subr.bf16.mxu0 0
    %1163 = vmatpush1.bf16.xpose.msra.mxu0 0
    %1164 = vmatprep.subr.bf16.mxu0 0
    %1165 = vmatpush1.bf16.xpose.msra.mxu0 0
    %1166 = vmatprep.subr.bf16.mxu0 0
    %1167 = vmatpush1.bf16.xpose.msra.mxu0 0
    %1168 = vmatprep.subr.bf16.mxu0 0
    %1169 = vmatpush1.bf16.xpose.msra.mxu0 0
    %1170 = vmatprep.subr.bf16.mxu0 0
    %1171 = vmatpush1.bf16.xpose.msra.mxu0 0
    %1172 = vmatprep.subr.bf16.mxu0 0
    %1173 = vmatpush1.bf16.xpose.msra.mxu0 0
    %1174 = vmatprep.subr.bf16.mxu0 0
    %1175 = vmatpush1.bf16.xpose.msra.mxu0 0
    %1176 = vmatprep.subr.bf16.mxu0 0
    %1177 = vmatpush1.bf16.xpose.msra.mxu0 0
    %1178 = vmatprep.subr.bf16.mxu0 0
    %1179 = vmatpush1.bf16.xpose.msra.mxu0 0
    %1180 = vmatprep.subr.bf16.mxu0 0
    %1181 = vmatpush1.bf16.xpose.msra.mxu0 0
    %1182 = vmatprep.subr.bf16.mxu0 0
    %1183 = vmatpush1.bf16.xpose.msra.mxu0 0
    %1184 = vmatprep.subr.bf16.mxu0 0
    %1185 = vmatpush1.bf16.xpose.msra.mxu0 0
    %1186 = vmatprep.subr.bf16.mxu0 0
    %1187 = vmatpush1.bf16.xpose.msra.mxu0 0
    %1188 = vmatprep.subr.bf16.mxu0 0
    %1189 = vmatpush1.bf16.xpose.msra.mxu0 0
    %1190 = vmatprep.subr.bf16.mxu0 0
    %1191 = vmatpush1.bf16.xpose.msra.mxu0 0
    %1192 = vmatprep.mubr.bf16.mxu0 0
    %1193 = vmatmul.mubr.bf16.gmra.mrb[0].mxu0 %v1155
    %v1194 = vpop.f32.mrb[0].mxu0
    %v1195 = vadd.f32 0.0, %v1194
    %v1196 = vpop.f32.mrb[0].mxu0
    %v1197 = vpop.f32.mrb[0].mxu0
    %v1198 = vpop.f32.mrb[0].mxu0
    %1199 = vdwg.mxu0
    %1201 = vrot.lane.b32.xlu0 %v1150, 96
    %v1202 = vpop.permute.xlu0 %1201
    %v1204 = vsel %vm293, %v1150, 0
    %v1207 = vsel %vm293, %v1202, 0
    %1209 = vmatprep.subr.bf16.mxu0 0
    %1210 = vmatpush1.bf16.xpose.msra.mxu0 %v1207
    %1211 = vmatprep.subr.bf16.mxu0 0
    %1212 = vmatpush1.bf16.xpose.msra.mxu0 0
    %1213 = vmatprep.subr.bf16.mxu0 0
    %1214 = vmatpush1.bf16.xpose.msra.mxu0 0
    %1215 = vmatprep.subr.bf16.mxu0 0
    %1216 = vmatpush1.bf16.xpose.msra.mxu0 0
    %1217 = vmatprep.subr.bf16.mxu0 0
    %1218 = vmatpush1.bf16.xpose.msra.mxu0 0
    %1219 = vmatprep.subr.bf16.mxu0 0
    %1220 = vmatpush1.bf16.xpose.msra.mxu0 0
    %1221 = vmatprep.subr.bf16.mxu0 0
    %1222 = vmatpush1.bf16.xpose.msra.mxu0 0
    %1223 = vmatprep.subr.bf16.mxu0 0
    %1224 = vmatpush1.bf16.xpose.msra.mxu0 0
    %1225 = vmatprep.subr.bf16.mxu0 0
    %1226 = vmatpush1.bf16.xpose.msra.mxu0 0
    %1227 = vmatprep.subr.bf16.mxu0 0
    %1228 = vmatpush1.bf16.xpose.msra.mxu0 0
    %1229 = vmatprep.subr.bf16.mxu0 0
    %1230 = vmatpush1.bf16.xpose.msra.mxu0 0
    %1231 = vmatprep.subr.bf16.mxu0 0
    %1232 = vmatpush1.bf16.xpose.msra.mxu0 0
    %1233 = vmatprep.subr.bf16.mxu0 0
    %1234 = vmatpush1.bf16.xpose.msra.mxu0 0
    %1235 = vmatprep.subr.bf16.mxu0 0
    %1236 = vmatpush1.bf16.xpose.msra.mxu0 0
    %1237 = vmatprep.subr.bf16.mxu0 0
    %1238 = vmatpush1.bf16.xpose.msra.mxu0 0
    %1239 = vmatprep.subr.bf16.mxu0 0
    %1240 = vmatpush1.bf16.xpose.msra.mxu0 0
    %1241 = vmatprep.mubr.bf16.mxu0 0
    %1242 = vmatmul.mubr.bf16.gmra.mrb[0].mxu0 %v1204
    %v1243 = vpop.f32.mrb[0].mxu0
    %v1244 = vadd.f32 0.0, %v1243
    %v1245 = vpop.f32.mrb[0].mxu0
    %v1246 = vpop.f32.mrb[0].mxu0
    %v1247 = vpop.f32.mrb[0].mxu0
    %1248 = vdwg.mxu0
    %v1249 = vmul.f32 %v1195, 0.25
    %v1250 = vmul.f32 %v1244, 0.25
    %v1251 = vadd.f32 %v1249, %v396
    %v1252 = vadd.f32 %v1250, %v400
    %v1253 = vsel %vm405, %v1251, -inf
    %1254 = vmax.xlane.f32.xlu0 %v1253
    %v1255 = vpop.xlane.xlu0 %1254
    %v1256 = vsel %vm405, %v1252, -inf
    %1257 = vmax.xlane.f32.xlu0 %v1256
    %v1258 = vpop.xlane.xlu0 %1257
    %v1259 = vsub.f32 %v1251, %v1255
    %v1260 = vsub.f32 %v1252, %v1258
    %v1261 = vmul.f32 %v1259, 1.442695
    %v1262 = vpow.pop %v1261
    %v1263 = vmul.f32 %v1260, 1.442695
    %v1264 = vpow.pop %v1263
    %v1265 = vsel %vm405, %v1262, 0.0
    %1266 = vadd.xlane.f32.xlu0 %v1265
    %v1267 = vpop.xlane.xlu0 %1266
    %v1268 = vsel %vm405, %v1264, 0.0
    %1269 = vadd.xlane.f32.xlu0 %v1268
    %v1270 = vpop.xlane.xlu0 %1269
    %v1271 = vrcp.pop %v1267
    %v1272 = vrcp.pop %v1270
    %v1273 = vmul.f32 %v1262, %v1271
    %v1274 = vmul.f32 %v1264, %v1272
    %v1275 = vpack.c.bf16 %v1273, %v1273
    %v1276 = vpack.c.bf16 %v1274, %v1274
    %1277 = vrot.lane.b32.xlu0 %v1149, 64
    %v1278 = vpop.permute.xlu0 %1277
    %v1280 = vsel %vm405, %v1275, 0
    %v1283 = vsel %vm435, %v1278, 0
    %1285 = vmatprep.subr.bf16.mxu0 0
    %1286 = vmatpush1.bf16.msra.mxu0 %v1283
    %1287 = vmatprep.subr.bf16.mxu0 0
    %1288 = vmatpush1.bf16.msra.mxu0 0
    %1289 = vmatprep.subr.bf16.mxu0 0
    %1290 = vmatpush1.bf16.msra.mxu0 0
    %1291 = vmatprep.subr.bf16.mxu0 0
    %1292 = vmatpush1.bf16.msra.mxu0 0
    %1293 = vmatprep.subr.bf16.mxu0 0
    %1294 = vmatpush1.bf16.msra.mxu0 0
    %1295 = vmatprep.subr.bf16.mxu0 0
    %1296 = vmatpush1.bf16.msra.mxu0 0
    %1297 = vmatprep.subr.bf16.mxu0 0
    %1298 = vmatpush1.bf16.msra.mxu0 0
    %1299 = vmatprep.subr.bf16.mxu0 0
    %1300 = vmatpush1.bf16.msra.mxu0 0
    %1301 = vmatprep.subr.bf16.mxu0 0
    %1302 = vmatpush1.bf16.msra.mxu0 0
    %1303 = vmatprep.subr.bf16.mxu0 0
    %1304 = vmatpush1.bf16.msra.mxu0 0
    %1305 = vmatprep.subr.bf16.mxu0 0
    %1306 = vmatpush1.bf16.msra.mxu0 0
    %1307 = vmatprep.subr.bf16.mxu0 0
    %1308 = vmatpush1.bf16.msra.mxu0 0
    %1309 = vmatprep.subr.bf16.mxu0 0
    %1310 = vmatpush1.bf16.msra.mxu0 0
    %1311 = vmatprep.subr.bf16.mxu0 0
    %1312 = vmatpush1.bf16.msra.mxu0 0
    %1313 = vmatprep.subr.bf16.mxu0 0
    %1314 = vmatpush1.bf16.msra.mxu0 0
    %1315 = vmatprep.subr.bf16.mxu0 0
    %1316 = vmatpush1.bf16.msra.mxu0 0
    %1317 = vmatprep.mubr.bf16.mxu0 0
    %1318 = vmatmul.mubr.bf16.gmra.mrb[0].mxu0 %v1280
    %v1319 = vpop.f32.mrb[0].mxu0
    %v1320 = vadd.f32 0.0, %v1319
    %v1321 = vpop.f32.mrb[0].mxu0
    %v1322 = vpop.f32.mrb[0].mxu0
    %v1323 = vpop.f32.mrb[0].mxu0
    %1324 = vdwg.mxu0
    %1325 = vrot.lane.b32.xlu0 %v1150, 64
    %v1326 = vpop.permute.xlu0 %1325
    %v1328 = vsel %vm405, %v1276, 0
    %v1331 = vsel %vm435, %v1326, 0
    %1333 = vmatprep.subr.bf16.mxu0 0
    %1334 = vmatpush1.bf16.msra.mxu0 %v1331
    %1335 = vmatprep.subr.bf16.mxu0 0
    %1336 = vmatpush1.bf16.msra.mxu0 0
    %1337 = vmatprep.subr.bf16.mxu0 0
    %1338 = vmatpush1.bf16.msra.mxu0 0
    %1339 = vmatprep.subr.bf16.mxu0 0
    %1340 = vmatpush1.bf16.msra.mxu0 0
    %1341 = vmatprep.subr.bf16.mxu0 0
    %1342 = vmatpush1.bf16.msra.mxu0 0
    %1343 = vmatprep.subr.bf16.mxu0 0
    %1344 = vmatpush1.bf16.msra.mxu0 0
    %1345 = vmatprep.subr.bf16.mxu0 0
    %1346 = vmatpush1.bf16.msra.mxu0 0
    %1347 = vmatprep.subr.bf16.mxu0 0
    %1348 = vmatpush1.bf16.msra.mxu0 0
    %1349 = vmatprep.subr.bf16.mxu0 0
    %1350 = vmatpush1.bf16.msra.mxu0 0
    %1351 = vmatprep.subr.bf16.mxu0 0
    %1352 = vmatpush1.bf16.msra.mxu0 0
    %1353 = vmatprep.subr.bf16.mxu0 0
    %1354 = vmatpush1.bf16.msra.mxu0 0
    %1355 = vmatprep.subr.bf16.mxu0 0
    %1356 = vmatpush1.bf16.msra.mxu0 0
    %1357 = vmatprep.subr.bf16.mxu0 0
    %1358 = vmatpush1.bf16.msra.mxu0 0
    %1359 = vmatprep.subr.bf16.mxu0 0
    %1360 = vmatpush1.bf16.msra.mxu0 0
    %1361 = vmatprep.subr.bf16.mxu0 0
    %1362 = vmatpush1.bf16.msra.mxu0 0
    %1363 = vmatprep.subr.bf16.mxu0 0
    %1364 = vmatpush1.bf16.msra.mxu0 0
    %1365 = vmatprep.mubr.bf16.mxu0 0
    %1366 = vmatmul.mubr.bf16.gmra.mrb[0].mxu0 %v1328
    %v1367 = vpop.f32.mrb[0].mxu0
    %v1368 = vadd.f32 0.0, %v1367
    %v1369 = vpop.f32.mrb[0].mxu0
    %v1370 = vpop.f32.mrb[0].mxu0
    %v1371 = vpop.f32.mrb[0].mxu0
    %1372 = vdwg.mxu0
    %1373 = vrot.lane.b32.xlu0 %v1149, 112
    %v1374 = vpop.permute.xlu0 %1373
    %1375 = vrot.lane.b32.xlu0 %v1149, 80
    %v1376 = vpop.permute.xlu0 %1375
    %v1378 = vsel %vm293, %v1374, 0
    %v1381 = vsel %vm293, %v1376, 0
    %1383 = vmatprep.subr.bf16.mxu0 0
    %1384 = vmatpush1.bf16.xpose.msra.mxu0 %v1381
    %1385 = vmatprep.subr.bf16.mxu0 0
    %1386 = vmatpush1.bf16.xpose.msra.mxu0 0
    %1387 = vmatprep.subr.bf16.mxu0 0
    %1388 = vmatpush1.bf16.xpose.msra.mxu0 0
    %1389 = vmatprep.subr.bf16.mxu0 0
    %1390 = vmatpush1.bf16.xpose.msra.mxu0 0
    %1391 = vmatprep.subr.bf16.mxu0 0
    %1392 = vmatpush1.bf16.xpose.msra.mxu0 0
    %1393 = vmatprep.subr.bf16.mxu0 0
    %1394 = vmatpush1.bf16.xpose.msra.mxu0 0
    %1395 = vmatprep.subr.bf16.mxu0 0
    %1396 = vmatpush1.bf16.xpose.msra.mxu0 0
    %1397 = vmatprep.subr.bf16.mxu0 0
    %1398 = vmatpush1.bf16.xpose.msra.mxu0 0
    %1399 = vmatprep.subr.bf16.mxu0 0
    %1400 = vmatpush1.bf16.xpose.msra.mxu0 0
    %1401 = vmatprep.subr.bf16.mxu0 0
    %1402 = vmatpush1.bf16.xpose.msra.mxu0 0
    %1403 = vmatprep.subr.bf16.mxu0 0
    %1404 = vmatpush1.bf16.xpose.msra.mxu0 0
    %1405 = vmatprep.subr.bf16.mxu0 0
    %1406 = vmatpush1.bf16.xpose.msra.mxu0 0
    %1407 = vmatprep.subr.bf16.mxu0 0
    %1408 = vmatpush1.bf16.xpose.msra.mxu0 0
    %1409 = vmatprep.subr.bf16.mxu0 0
    %1410 = vmatpush1.bf16.xpose.msra.mxu0 0
    %1411 = vmatprep.subr.bf16.mxu0 0
    %1412 = vmatpush1.bf16.xpose.msra.mxu0 0
    %1413 = vmatprep.subr.bf16.mxu0 0
    %1414 = vmatpush1.bf16.xpose.msra.mxu0 0
    %1415 = vmatprep.mubr.bf16.mxu0 0
    %1416 = vmatmul.mubr.bf16.gmra.mrb[0].mxu0 %v1378
    %v1417 = vpop.f32.mrb[0].mxu0
    %v1418 = vadd.f32 0.0, %v1417
    %v1419 = vpop.f32.mrb[0].mxu0
    %v1420 = vpop.f32.mrb[0].mxu0
    %v1421 = vpop.f32.mrb[0].mxu0
    %1422 = vdwg.mxu0
    %1423 = vrot.lane.b32.xlu0 %v1150, 112
    %v1424 = vpop.permute.xlu0 %1423
    %1425 = vrot.lane.b32.xlu0 %v1150, 80
    %v1426 = vpop.permute.xlu0 %1425
    %v1428 = vsel %vm293, %v1424, 0
    %v1431 = vsel %vm293, %v1426, 0
    %1433 = vmatprep.subr.bf16.mxu0 0
    %1434 = vmatpush1.bf16.xpose.msra.mxu0 %v1431
    %1435 = vmatprep.subr.bf16.mxu0 0
    %1436 = vmatpush1.bf16.xpose.msra.mxu0 0
    %1437 = vmatprep.subr.bf16.mxu0 0
    %1438 = vmatpush1.bf16.xpose.msra.mxu0 0
    %1439 = vmatprep.subr.bf16.mxu0 0
    %1440 = vmatpush1.bf16.xpose.msra.mxu0 0
    %1441 = vmatprep.subr.bf16.mxu0 0
    %1442 = vmatpush1.bf16.xpose.msra.mxu0 0
    %1443 = vmatprep.subr.bf16.mxu0 0
    %1444 = vmatpush1.bf16.xpose.msra.mxu0 0
    %1445 = vmatprep.subr.bf16.mxu0 0
    %1446 = vmatpush1.bf16.xpose.msra.mxu0 0
    %1447 = vmatprep.subr.bf16.mxu0 0
    %1448 = vmatpush1.bf16.xpose.msra.mxu0 0
    %1449 = vmatprep.subr.bf16.mxu0 0
    %1450 = vmatpush1.bf16.xpose.msra.mxu0 0
    %1451 = vmatprep.subr.bf16.mxu0 0
    %1452 = vmatpush1.bf16.xpose.msra.mxu0 0
    %1453 = vmatprep.subr.bf16.mxu0 0
    %1454 = vmatpush1.bf16.xpose.msra.mxu0 0
    %1455 = vmatprep.subr.bf16.mxu0 0
    %1456 = vmatpush1.bf16.xpose.msra.mxu0 0
    %1457 = vmatprep.subr.bf16.mxu0 0
    %1458 = vmatpush1.bf16.xpose.msra.mxu0 0
    %1459 = vmatprep.subr.bf16.mxu0 0
    %1460 = vmatpush1.bf16.xpose.msra.mxu0 0
    %1461 = vmatprep.subr.bf16.mxu0 0
    %1462 = vmatpush1.bf16.xpose.msra.mxu0 0
    %1463 = vmatprep.subr.bf16.mxu0 0
    %1464 = vmatpush1.bf16.xpose.msra.mxu0 0
    %1465 = vmatprep.mubr.bf16.mxu0 0
    %1466 = vmatmul.mubr.bf16.gmra.mrb[0].mxu0 %v1428
    %v1467 = vpop.f32.mrb[0].mxu0
    %v1468 = vadd.f32 0.0, %v1467
    %v1469 = vpop.f32.mrb[0].mxu0
    %v1470 = vpop.f32.mrb[0].mxu0
    %v1471 = vpop.f32.mrb[0].mxu0
    %1472 = vdwg.mxu0
    %v1473 = vmul.f32 %v1418, 0.25
    %v1474 = vmul.f32 %v1468, 0.25
    %v1475 = vadd.f32 %v1473, %v396
    %v1476 = vadd.f32 %v1474, %v400
    %v1477 = vsel %vm405, %v1475, -inf
    %1478 = vmax.xlane.f32.xlu0 %v1477
    %v1479 = vpop.xlane.xlu0 %1478
    %v1480 = vsel %vm405, %v1476, -inf
    %1481 = vmax.xlane.f32.xlu0 %v1480
    %v1482 = vpop.xlane.xlu0 %1481
    %v1483 = vsub.f32 %v1475, %v1479
    %v1484 = vsub.f32 %v1476, %v1482
    %v1485 = vmul.f32 %v1483, 1.442695
    %v1486 = vpow.pop %v1485
    %v1487 = vmul.f32 %v1484, 1.442695
    %v1488 = vpow.pop %v1487
    %v1489 = vsel %vm405, %v1486, 0.0
    %1490 = vadd.xlane.f32.xlu0 %v1489
    %v1491 = vpop.xlane.xlu0 %1490
    %v1492 = vsel %vm405, %v1488, 0.0
    %1493 = vadd.xlane.f32.xlu0 %v1492
    %v1494 = vpop.xlane.xlu0 %1493
    %v1495 = vrcp.pop %v1491
    %v1496 = vrcp.pop %v1494
    %v1497 = vmul.f32 %v1486, %v1495
    %v1498 = vmul.f32 %v1488, %v1496
    %v1499 = vpack.c.bf16 %v1497, %v1497
    %v1500 = vpack.c.bf16 %v1498, %v1498
    %1501 = vrot.lane.b32.xlu0 %v1149, 48
    %v1502 = vpop.permute.xlu0 %1501
    %v1504 = vsel %vm405, %v1499, 0
    %v1507 = vsel %vm435, %v1502, 0
    %1509 = vmatprep.subr.bf16.mxu0 0
    %1510 = vmatpush1.bf16.msra.mxu0 %v1507
    %1511 = vmatprep.subr.bf16.mxu0 0
    %1512 = vmatpush1.bf16.msra.mxu0 0
    %1513 = vmatprep.subr.bf16.mxu0 0
    %1514 = vmatpush1.bf16.msra.mxu0 0
    %1515 = vmatprep.subr.bf16.mxu0 0
    %1516 = vmatpush1.bf16.msra.mxu0 0
    %1517 = vmatprep.subr.bf16.mxu0 0
    %1518 = vmatpush1.bf16.msra.mxu0 0
    %1519 = vmatprep.subr.bf16.mxu0 0
    %1520 = vmatpush1.bf16.msra.mxu0 0
    %1521 = vmatprep.subr.bf16.mxu0 0
    %1522 = vmatpush1.bf16.msra.mxu0 0
    %1523 = vmatprep.subr.bf16.mxu0 0
    %1524 = vmatpush1.bf16.msra.mxu0 0
    %1525 = vmatprep.subr.bf16.mxu0 0
    %1526 = vmatpush1.bf16.msra.mxu0 0
    %1527 = vmatprep.subr.bf16.mxu0 0
    %1528 = vmatpush1.bf16.msra.mxu0 0
    %1529 = vmatprep.subr.bf16.mxu0 0
    %1530 = vmatpush1.bf16.msra.mxu0 0
    %1531 = vmatprep.subr.bf16.mxu0 0
    %1532 = vmatpush1.bf16.msra.mxu0 0
    %1533 = vmatprep.subr.bf16.mxu0 0
    %1534 = vmatpush1.bf16.msra.mxu0 0
    %1535 = vmatprep.subr.bf16.mxu0 0
    %1536 = vmatpush1.bf16.msra.mxu0 0
    %1537 = vmatprep.subr.bf16.mxu0 0
    %1538 = vmatpush1.bf16.msra.mxu0 0
    %1539 = vmatprep.subr.bf16.mxu0 0
    %1540 = vmatpush1.bf16.msra.mxu0 0
    %1541 = vmatprep.mubr.bf16.mxu0 0
    %1542 = vmatmul.mubr.bf16.gmra.mrb[0].mxu0 %v1504
    %v1543 = vpop.f32.mrb[0].mxu0
    %v1544 = vadd.f32 0.0, %v1543
    %v1545 = vpop.f32.mrb[0].mxu0
    %v1546 = vpop.f32.mrb[0].mxu0
    %v1547 = vpop.f32.mrb[0].mxu0
    %1548 = vdwg.mxu0
    %1549 = vrot.lane.b32.xlu0 %v1150, 48
    %v1550 = vpop.permute.xlu0 %1549
    %v1552 = vsel %vm405, %v1500, 0
    %v1555 = vsel %vm435, %v1550, 0
    %1557 = vmatprep.subr.bf16.mxu0 0
    %1558 = vmatpush1.bf16.msra.mxu0 %v1555
    %1559 = vmatprep.subr.bf16.mxu0 0
    %1560 = vmatpush1.bf16.msra.mxu0 0
    %1561 = vmatprep.subr.bf16.mxu0 0
    %1562 = vmatpush1.bf16.msra.mxu0 0
    %1563 = vmatprep.subr.bf16.mxu0 0
    %1564 = vmatpush1.bf16.msra.mxu0 0
    %1565 = vmatprep.subr.bf16.mxu0 0
    %1566 = vmatpush1.bf16.msra.mxu0 0
    %1567 = vmatprep.subr.bf16.mxu0 0
    %1568 = vmatpush1.bf16.msra.mxu0 0
    %1569 = vmatprep.subr.bf16.mxu0 0
    %1570 = vmatpush1.bf16.msra.mxu0 0
    %1571 = vmatprep.subr.bf16.mxu0 0
    %1572 = vmatpush1.bf16.msra.mxu0 0
    %1573 = vmatprep.subr.bf16.mxu0 0
    %1574 = vmatpush1.bf16.msra.mxu0 0
    %1575 = vmatprep.subr.bf16.mxu0 0
    %1576 = vmatpush1.bf16.msra.mxu0 0
    %1577 = vmatprep.subr.bf16.mxu0 0
    %1578 = vmatpush1.bf16.msra.mxu0 0
    %1579 = vmatprep.subr.bf16.mxu0 0
    %1580 = vmatpush1.bf16.msra.mxu0 0
    %1581 = vmatprep.subr.bf16.mxu0 0
    %1582 = vmatpush1.bf16.msra.mxu0 0
    %1583 = vmatprep.subr.bf16.mxu0 0
    %1584 = vmatpush1.bf16.msra.mxu0 0
    %1585 = vmatprep.subr.bf16.mxu0 0
    %1586 = vmatpush1.bf16.msra.mxu0 0
    %1587 = vmatprep.subr.bf16.mxu0 0
    %1588 = vmatpush1.bf16.msra.mxu0 0
    %1589 = vmatprep.mubr.bf16.mxu0 0
    %1590 = vmatmul.mubr.bf16.gmra.mrb[0].mxu0 %v1552
    %v1591 = vpop.f32.mrb[0].mxu0
    %v1592 = vadd.f32 0.0, %v1591
    %v1593 = vpop.f32.mrb[0].mxu0
    %v1594 = vpop.f32.mrb[0].mxu0
    %v1595 = vpop.f32.mrb[0].mxu0
    %1596 = vdwg.mxu0
    %1599 = vrot.lane.b32.xlu0 %v1544, 16
    %v1600 = vpop.permute.xlu0 %1599
    %1601 = vrot.lane.b32.xlu0 %v1592, 16
    %v1602 = vpop.permute.xlu0 %1601
    %v1605 = vsel %vm293, %v1320, %v1600
    %v1606 = vsel %vm293, %v1368, %v1602
    %v1607 = vpack.c.bf16 %v1606, %v1605
    %v1608 = vlaneseq
    %v1609 = vshrl.u32 %v1608, 7
    %v1610 = vsub.s32 0, %v1609
    %v1611 = vrot.slane %v1085, %v1610
    %v1616 = vunpack.c.l.b16 %v1064
    %v1617 = vunpack.c.l.b16 %v1065
    %v1618 = vunpack.c.l.b16 %v1066
    %v1619 = vunpack.c.l.b16 %v1067
    %v1620 = vpack.c.b16 %v1617, %v1616
    %v1621 = vpack.c.b16 %v1619, %v1618
    %v1625 = vsel %vm160, %v1607, 0
    %1627 = vmatprep.subr.bf16.mxu0 0
    %1628 = vmatpush1.bf16.msra.mxu0 %v1620
    %1629 = vmatprep.subr.bf16.mxu0 0
    %1630 = vmatpush1.bf16.msra.mxu0 %v1621
    %1631 = vmatprep.subr.bf16.mxu0 0
    %1632 = vmatpush1.bf16.msra.mxu0 0
    %1633 = vmatprep.subr.bf16.mxu0 0
    %1634 = vmatpush1.bf16.msra.mxu0 0
    %1635 = vmatprep.subr.bf16.mxu0 0
    %1636 = vmatpush1.bf16.msra.mxu0 0
    %1637 = vmatprep.subr.bf16.mxu0 0
    %1638 = vmatpush1.bf16.msra.mxu0 0
    %1639 = vmatprep.subr.bf16.mxu0 0
    %1640 = vmatpush1.bf16.msra.mxu0 0
    %1641 = vmatprep.subr.bf16.mxu0 0
    %1642 = vmatpush1.bf16.msra.mxu0 0
    %1643 = vmatprep.subr.bf16.mxu0 0
    %1644 = vmatpush1.bf16.msra.mxu0 0
    %1645 = vmatprep.subr.bf16.mxu0 0
    %1646 = vmatpush1.bf16.msra.mxu0 0
    %1647 = vmatprep.subr.bf16.mxu0 0
    %1648 = vmatpush1.bf16.msra.mxu0 0
    %1649 = vmatprep.subr.bf16.mxu0 0
    %1650 = vmatpush1.bf16.msra.mxu0 0
    %1651 = vmatprep.subr.bf16.mxu0 0
    %1652 = vmatpush1.bf16.msra.mxu0 0
    %1653 = vmatprep.subr.bf16.mxu0 0
    %1654 = vmatpush1.bf16.msra.mxu0 0
    %1655 = vmatprep.subr.bf16.mxu0 0
    %1656 = vmatpush1.bf16.msra.mxu0 0
    %1657 = vmatprep.subr.bf16.mxu0 0
    %1658 = vmatpush1.bf16.msra.mxu0 0
    %1659 = vmatprep.mubr.bf16.mxu0 0
    %1660 = vmatmul.mubr.bf16.gmra.mrb[0].mxu0 %v1625
    %v1661 = vpop.f32.mrb[0].mxu0
    %v1662 = vadd.f32 %v1611, %v1661
    %v1663 = vpop.f32.mrb[0].mxu0
    %v1664 = vpop.f32.mrb[0].mxu0
    %v1665 = vadd.f32 %v1611, %v1664
    %v1666 = vpop.f32.mrb[0].mxu0
    %1667 = vdwg.mxu0
    %v1668 = vadd.f32 %v1054, %v1662
    %v1669 = vadd.f32 %v1055, %v1665
    %v1670 = vsel %vm160, %v1668, 0.0
    %1671 = vadd.xlane.f32.xlu0 %v1670
    %v1672 = vpop.xlane.xlu0 %1671
    %v1673 = vsel %vm160, %v1669, 0.0
    %1674 = vadd.xlane.f32.xlu0 %v1673
    %v1675 = vpop.xlane.xlu0 %1674
    %v1676 = vmul.f32 %v1672, %v167
    %v1677 = vmul.f32 %v1675, %v167
    %v1678 = vsub.f32 %v1668, %v1676
    %v1679 = vsub.f32 %v1669, %v1677
    %v1680 = vmul.f32 %v1678, %v1678
    %v1681 = vmul.f32 %v1679, %v1679
    %v1682 = vsel %vm160, %v1680, 0.0
    %1683 = vadd.xlane.f32.xlu0 %v1682
    %v1684 = vpop.xlane.xlu0 %1683
    %v1685 = vsel %vm160, %v1681, 0.0
    %1686 = vadd.xlane.f32.xlu0 %v1685
    %v1687 = vpop.xlane.xlu0 %1686
    %v1688 = vmul.f32 %v1684, %v167
    %v1689 = vmul.f32 %v1687, %v167
    %v1690 = vadd.f32 %v1688, 1e-12
    %v1691 = vadd.f32 %v1689, 1e-12
    %v1692 = vrsqrt.pop %v1690
    %v1693 = vrsqrt.pop %v1691
    %v1694 = vmul.f32 %v1678, %v1692
    %v1695 = vmul.f32 %v1679, %v1693
    %v1696 = vlaneseq
    %v1697 = vshrl.u32 %v1696, 7
    %v1698 = vsub.s32 1, %v1697
    %v1699 = vrot.slane %v1085, %v1698
    %v1700 = vmul.f32 %v1694, %v1699
    %v1701 = vmul.f32 %v1695, %v1699
    %v1702 = vlaneseq
    %v1703 = vshrl.u32 %v1702, 7
    %v1704 = vsub.s32 2, %v1703
    %v1705 = vrot.slane %v1085, %v1704
    %v1706 = vadd.f32 %v1700, %v1705
    %v1707 = vadd.f32 %v1701, %v1705
    %v1708 = vpack.c.bf16 %v1707, %v1706
    %v1710 = vlaneseq
    %v1711 = vshrl.u32 %v1710, 7
    %v1712 = vsub.s32 0, %v1711
    %v1713 = vrot.slane %v1074, %v1712
    %v1719 = vunpack.c.l.b16 %v1069
    %v1720 = vunpack.c.l.b16 %v1070
    %v1721 = vunpack.c.l.b16 %v1071
    %v1722 = vunpack.c.l.b16 %v1072
    %v1723 = vpack.c.b16 %v1720, %v1719
    %v1724 = vpack.c.b16 %v1722, %v1721
    %v1728 = vsel %vm160, %v1708, 0
    %1730 = vmatprep.subr.bf16.mxu0 0
    %1731 = vmatpush1.bf16.msra.mxu0 %v1723
    %1732 = vmatprep.subr.bf16.mxu0 0
    %1733 = vmatpush1.bf16.msra.mxu0 %v1724
    %1734 = vmatprep.subr.bf16.mxu0 0
    %1735 = vmatpush1.bf16.msra.mxu0 0
    %1736 = vmatprep.subr.bf16.mxu0 0
    %1737 = vmatpush1.bf16.msra.mxu0 0
    %1738 = vmatprep.subr.bf16.mxu0 0
    %1739 = vmatpush1.bf16.msra.mxu0 0
    %1740 = vmatprep.subr.bf16.mxu0 0
    %1741 = vmatpush1.bf16.msra.mxu0 0
    %1742 = vmatprep.subr.bf16.mxu0 0
    %1743 = vmatpush1.bf16.msra.mxu0 0
    %1744 = vmatprep.subr.bf16.mxu0 0
    %1745 = vmatpush1.bf16.msra.mxu0 0
    %1746 = vmatprep.subr.bf16.mxu0 0
    %1747 = vmatpush1.bf16.msra.mxu0 0
    %1748 = vmatprep.subr.bf16.mxu0 0
    %1749 = vmatpush1.bf16.msra.mxu0 0
    %1750 = vmatprep.subr.bf16.mxu0 0
    %1751 = vmatpush1.bf16.msra.mxu0 0
    %1752 = vmatprep.subr.bf16.mxu0 0
    %1753 = vmatpush1.bf16.msra.mxu0 0
    %1754 = vmatprep.subr.bf16.mxu0 0
    %1755 = vmatpush1.bf16.msra.mxu0 0
    %1756 = vmatprep.subr.bf16.mxu0 0
    %1757 = vmatpush1.bf16.msra.mxu0 0
    %1758 = vmatprep.subr.bf16.mxu0 0
    %1759 = vmatpush1.bf16.msra.mxu0 0
    %1760 = vmatprep.subr.bf16.mxu0 0
    %1761 = vmatpush1.bf16.msra.mxu0 0
    %1762 = vmatprep.mubr.bf16.mxu0 0
    %1763 = vmatmul.mubr.bf16.gmra.mrb[0].mxu0 %v1728
    %v1764 = vpop.f32.mrb[0].mxu0
    %v1765 = vadd.f32 %v1713, %v1764
    %v1766 = vpop.f32.mrb[0].mxu0
    %v1767 = vpop.f32.mrb[0].mxu0
    %v1768 = vadd.f32 %v1713, %v1767
    %v1769 = vpop.f32.mrb[0].mxu0
    %1770 = vdwg.mxu0
    %v1771 = vmul.f32 %v1765, %v1765
    %v1772 = vmul.f32 %v1768, %v1768
    %v1773 = vmul.f32 %v1765, %v1771
    %v1774 = vmul.f32 %v1768, %v1772
    %v1775 = vmul.f32 %v1773, 0.044715
    %v1776 = vmul.f32 %v1774, 0.044715
    %v1777 = vadd.f32 %v1765, %v1775
    %v1778 = vadd.f32 %v1768, %v1776
    %v1779 = vmul.f32 %v1777, 0.7978846
    %v1780 = vmul.f32 %v1778, 0.7978846
    %v1781 = vtanh.pop %v1779
    %v1782 = vtanh.pop %v1780
    %v1783 = vadd.f32 %v1781, 1.0
    %v1784 = vadd.f32 %v1782, 1.0
    %v1785 = vmul.f32 %v1783, 0.5
    %v1786 = vmul.f32 %v1784, 0.5
    %v1787 = vmul.f32 %v1765, %v1785
    %v1788 = vmul.f32 %v1768, %v1786
    %v1789 = vpack.c.bf16 %v1788, %v1787
    %v1790 = vlaneseq
    %v1791 = vshrl.u32 %v1790, 7
    %v1792 = vsub.s32 3, %v1791
    %v1793 = vrot.slane %v1085, %v1792
    %v1802 = vunpack.c.l.b16 %v1076
    %v1803 = vunpack.c.l.b16 %v1077
    %v1804 = vunpack.c.l.b16 %v1078
    %v1805 = vunpack.c.l.b16 %v1079
    %v1806 = vunpack.c.l.b16 %v1080
    %v1807 = vunpack.c.l.b16 %v1081
    %v1808 = vunpack.c.l.b16 %v1082
    %v1809 = vunpack.c.l.b16 %v1083
    %v1810 = vpack.c.b16 %v1803, %v1802
    %v1811 = vpack.c.b16 %v1805, %v1804
    %v1812 = vpack.c.b16 %v1807, %v1806
    %v1813 = vpack.c.b16 %v1809, %v1808
    %v1819 = vsel %vm74, %v1789, 0
    %1821 = vmatprep.subr.bf16.mxu0 0
    %1822 = vmatpush1.bf16.msra.mxu0 %v1810
    %1823 = vmatprep.subr.bf16.mxu0 0
    %1824 = vmatpush1.bf16.msra.mxu0 %v1811
    %1825 = vmatprep.subr.bf16.mxu0 0
    %1826 = vmatpush1.bf16.msra.mxu0 %v1812
    %1827 = vmatprep.subr.bf16.mxu0 0
    %1828 = vmatpush1.bf16.msra.mxu0 %v1813
    %1829 = vmatprep.subr.bf16.mxu0 0
    %1830 = vmatpush1.bf16.msra.mxu0 0
    %1831 = vmatprep.subr.bf16.mxu0 0
    %1832 = vmatpush1.bf16.msra.mxu0 0
    %1833 = vmatprep.subr.bf16.mxu0 0
    %1834 = vmatpush1.bf16.msra.mxu0 0
    %1835 = vmatprep.subr.bf16.mxu0 0
    %1836 = vmatpush1.bf16.msra.mxu0 0
    %1837 = vmatprep.subr.bf16.mxu0 0
    %1838 = vmatpush1.bf16.msra.mxu0 0
    %1839 = vmatprep.subr.bf16.mxu0 0
    %1840 = vmatpush1.bf16.msra.mxu0 0
    %1841 = vmatprep.subr.bf16.mxu0 0
    %1842 = vmatpush1.bf16.msra.mxu0 0
    %1843 = vmatprep.subr.bf16.mxu0 0
    %1844 = vmatpush1.bf16.msra.mxu0 0
    %1845 = vmatprep.subr.bf16.mxu0 0
    %1846 = vmatpush1.bf16.msra.mxu0 0
    %1847 = vmatprep.subr.bf16.mxu0 0
    %1848 = vmatpush1.bf16.msra.mxu0 0
    %1849 = vmatprep.subr.bf16.mxu0 0
    %1850 = vmatpush1.bf16.msra.mxu0 0
    %1851 = vmatprep.subr.bf16.mxu0 0
    %1852 = vmatpush1.bf16.msra.mxu0 0
    %1853 = vmatprep.mubr.bf16.mxu0 0
    %1854 = vmatmul.mubr.bf16.gmra.mrb[0].mxu0 %v1819
    %v1855 = vpop.f32.mrb[0].mxu0
    %v1856 = vadd.f32 %v1793, %v1855
    %v1857 = vpop.f32.mrb[0].mxu0
    %v1858 = vpop.f32.mrb[0].mxu0
    %v1859 = vadd.f32 %v1793, %v1858
    %v1860 = vpop.f32.mrb[0].mxu0
    %1861 = vdwg.mxu0
    %v1862 = vadd.f32 %v1706, %v1856
    %v1863 = vadd.f32 %v1707, %v1859
    %v1864 = vsel %vm160, %v1862, 0.0
    %1865 = vadd.xlane.f32.xlu0 %v1864
    %v1866 = vpop.xlane.xlu0 %1865
    %v1867 = vsel %vm160, %v1863, 0.0
    %1868 = vadd.xlane.f32.xlu0 %v1867
    %v1869 = vpop.xlane.xlu0 %1868
    %v1870 = vmul.f32 %v1866, %v167
    %v1871 = vmul.f32 %v1869, %v167
    %v1872 = vsub.f32 %v1862, %v1870
    %v1873 = vsub.f32 %v1863, %v1871
    %v1874 = vmul.f32 %v1872, %v1872
    %v1875 = vmul.f32 %v1873, %v1873
    %v1876 = vsel %vm160, %v1874, 0.0
    %1877 = vadd.xlane.f32.xlu0 %v1876
    %v1878 = vpop.xlane.xlu0 %1877
    %v1879 = vsel %vm160, %v1875, 0.0
    %1880 = vadd.xlane.f32.xlu0 %v1879
    %v1881 = vpop.xlane.xlu0 %1880
    %v1882 = vmul.f32 %v1878, %v167
    %v1883 = vmul.f32 %v1881, %v167
    %v1884 = vadd.f32 %v1882, 1e-12
    %v1885 = vadd.f32 %v1883, 1e-12
    %v1886 = vrsqrt.pop %v1884
    %v1887 = vrsqrt.pop %v1885
    %v1888 = vmul.f32 %v1872, %v1886
    %v1889 = vmul.f32 %v1873, %v1887
    %v1890 = vlaneseq
    %v1891 = vshrl.u32 %v1890, 7
    %v1892 = vsub.s32 4, %v1891
    %v1893 = vrot.slane %v1085, %v1892
    %v1894 = vmul.f32 %v1888, %v1893
    %v1895 = vmul.f32 %v1889, %v1893
    %v1896 = vlaneseq
    %v1897 = vshrl.u32 %v1896, 7
    %v1898 = vsub.s32 5, %v1897
    %v1899 = vrot.slane %v1085, %v1898
    %v1900 = vadd.f32 %v1894, %v1899
    %v1901 = vadd.f32 %v1895, %v1899
    %v1904 = vrot.slane %v1901, 7
    %vm1905 = vcmask 1041409
    %v1906 = vsel %vm1905, %v1904, %v1900
    %v1908 = vrot.slane %v1900, 1
    %v1909 = vsel %vm1905, %v1901, %v1908
    %1910 = vrot.lane.b32.xlu0 %v1909, 32
    %v1911 = vpop.permute.xlu0 %1910
    %v1913 = vrot.slane %v1900, 2
    %v1914 = vrot.slane %v1901, 1
    %v1915 = vsel %vm1905, %v1914, %v1913
    %1916 = vrot.lane.b32.xlu0 %v1915, 64
    %v1917 = vpop.permute.xlu0 %1916
    %v1919 = vrot.slane %v1900, 3
    %v1920 = vrot.slane %v1901, 2
    %v1921 = vsel %vm1905, %v1920, %v1919
    %1922 = vrot.lane.b32.xlu0 %v1921, 96
    %v1923 = vpop.permute.xlu0 %1922
    %v1925 = vrot.slane %v1900, 4
    %v1926 = vrot.slane %v1901, 3
    %v1927 = vsel %vm1905, %v1926, %v1925
    %v1929 = vrot.slane %v1900, 5
    %v1930 = vrot.slane %v1901, 4
    %v1931 = vsel %vm1905, %v1930, %v1929
    %1932 = vrot.lane.b32.xlu0 %v1931, 32
    %v1933 = vpop.permute.xlu0 %1932
    %v1935 = vrot.slane %v1900, 6
    %v1936 = vrot.slane %v1901, 5
    %v1937 = vsel %vm1905, %v1936, %v1935
    %1938 = vrot.lane.b32.xlu0 %v1937, 64
    %v1939 = vpop.permute.xlu0 %1938
    %v1941 = vrot.slane %v1900, 7
    %v1942 = vrot.slane %v1901, 6
    %v1943 = vsel %vm1905, %v1942, %v1941
    %1944 = vrot.lane.b32.xlu0 %v1943, 96
    %v1945 = vpop.permute.xlu0 %1944
    %v1947 = vsel %vm160, %v1906, %v1911
    %v1948 = vsel %vm74, %v1947, %v1917
    %vm1949 = vcmask 785408
    %v1950 = vsel %vm1949, %v1948, %v1923
    %v1951 = vsel %vm160, %v1927, %v1933
    %v1952 = vsel %vm74, %v1951, %v1939
    %v1953 = vsel %vm1949, %v1952, %v1945
    %v1956 = vcombine.low %v1950, %v1953
    %v1958 = vunpack.c.l.s4 1983009808
    %v1959 = vunpack.c.0.s8 %v1958
    %v1960 = vlaneseq
    %v1961 = vshrl.u32 %v1960, 7
    %v1962 = vsub.s32 %v1959, %v1961
    %v1963 = vrot.slane %v1956, %v1962
    %1965 = vst [vmem:[#allocation2] sm:$0xf] %v1963
    // Predicated region
    $region50: #{tpu_custom_call.1} parent=1 // pred_check
      _
    $region51: #{tpu_custom_call.1} parent=1 // pred_check_branch
      %1967 = sbr.rel (0) target = $region53
    $region52: #{tpu_custom_call.1} parent=1 // pred_region
      %s1969 = ssub.s32 64, 64
      %1970 = vsyncadd [#allocation3], %s1969
      %s1972 = sshll.u32 [#allocation2], 4
      %s1973 = int_to_ptr.vmem [resolvable:$true] %s1972
      %1975 = dma.vmem_to_hbm [thread:$0]  %s1973, 64, %s12, [#allocation3]
    $region53: #{tpu_custom_call.1} parent=1 // pred_fallthru
      _
    // Predicated region
    $region54: #{tpu_custom_call.1} parent=1 // pred_check
      _
    $region55: #{tpu_custom_call.1} parent=1 // pred_check_branch
      %1977 = sbr.rel (0) target = $region57
    $region56: #{tpu_custom_call.1} parent=1 // pred_region
      %1978 = dma.done [#allocation3], 64
    $region57: #{tpu_custom_call.1} parent=1 // pred_fallthru
      _
    %1979 = vsyncpa [#allocation3], 1

</llo_original>
